<compile_context>
chip_gen: v7x
topology: tpu7x:2x2x1
jax: 0.10.0
libtpu: 0.0.40
codegen_flags: <defaults>
</compile_context>

<pallas_src>
import functools
import jax
import jax.numpy as jnp
from jax.experimental import pallas as pl
from jax.experimental.pallas import tpu as pltpu


# ----------------------------- helpers -----------------------------

def _pad_to(n, m):
    return ((n + m - 1) // m) * m


def _tpu_caps():
    """Best-effort query of VMEM capacity and a per-generation max batch tile."""
    vmem_cap = 64 << 20          # conservative fallback (v7x-sized)
    max_tile = 256               # fills the 256x256 MXU on v6e/v7x
    try:
        vmem_cap = int(pltpu.get_tpu_info().vmem_capacity_bytes)
    except Exception:
        pass
    try:
        kind = jax.devices()[0].device_kind.lower()
        if "v5e" in kind or "v5 lite" in kind or "v5lite" in kind:
            max_tile = 128       # v5e MXUs are 128x128
    except Exception:
        pass
    return max_tile, vmem_cap


# ----------------------------- fused Pallas kernel -----------------------------

def _vde_fused_kernel(x_ref, eps_ref, *refs, n_enc, n_dec, enc_p):
    """Entire VDE forward on one batch tile; all params resident in VMEM.

    refs = [W0, b0, ...]                    (2*n_enc encoder params, all Swish)
           [W_head, b_head]                 (merged, enc_out-folded mu/log_var head)
           [W0, b0, ...]                    (2*n_dec decoder params)
           [recons_ref, mu_ref, logvar_ref] (outputs)
    Weights are bf16; biases f32.  Matmuls use bf16 operands + f32 accumulation.
    """
    recon_ref, mu_ref, lv_ref = refs[-3:]
    prm = refs[:-3]

    def lin(h, w_ref, b_ref, swish):
        y = jnp.dot(h.astype(w_ref.dtype), w_ref[...],
                    preferred_element_type=jnp.float32)
        y = y + b_ref[...]                      # f32 bias, [1, N] broadcasts
        if swish:
            y = y * jax.nn.sigmoid(y)           # Swish(x) = x * sigmoid(x)
        return y

    # --- encoder MLP (all remaining encoder layers carry Swish) ---
    h = x_ref[...]
    for li in range(n_enc):
        h = lin(h, prm[2 * li], prm[2 * li + 1], swish=True)

    # --- folded enc_out + mu/log_var head, in-kernel reparameterization ---
    muvar = lin(h, prm[2 * n_enc], prm[2 * n_enc + 1], swish=False)
    mu = muvar[:, :enc_p]                       # lane-aligned split (enc_p % 128 == 0)
    log_var = muvar[:, enc_p:]
    # Store mu/log_var NOW: frees ~2*(tile_m, enc_p) of live vregs before the
    # decoder loop and uses the otherwise-idle vst slot.
    mu_ref[...] = mu.astype(mu_ref.dtype)
    lv_ref[...] = log_var.astype(lv_ref.dtype)
    z = eps_ref[...] * jnp.exp(0.5 * log_var) + mu

    # --- decoder MLP (Swish on all but its output layer) ---
    d = z
    base = 2 * n_enc + 2
    for li in range(n_dec):
        d = lin(d, prm[base + 2 * li], prm[base + 2 * li + 1],
                swish=(li < n_dec - 1))

    recon_ref[...] = d.astype(recon_ref.dtype)


# ----------------------------- parameter setup -----------------------------

def _init_linear(key, fan_in, fan_out):
    """Deterministic init mimicking torch's default uniform(-1/sqrt(fan_in), ...)."""
    kw, kb = jax.random.split(key)
    bound = 1.0 / jnp.sqrt(fan_in)
    w = jax.random.uniform(kw, (fan_in, fan_out), jnp.float32, -bound, bound)
    b = jax.random.uniform(kb, (fan_out,), jnp.float32, -bound, bound)
    return w, b


def init_vde_params(key, input_size, hidden_size, encoder_size, hidden_layer_depth=3):
    """Shapes follow VDE.__init__ exactly (hidden_layer_depth - 1 inner layers)."""
    n_inner = hidden_layer_depth - 1  # = 2 for default depth 3
    keys = iter(jax.random.split(key, 32))
    p = {}
    # Encoder: input (in->hid, Swish), n_inner x (hid->hid, Swish), output (hid->hid)
    p["enc_in"] = _init_linear(next(keys), input_size, hidden_size)
    p["enc_hidden"] = [_init_linear(next(keys), hidden_size, hidden_size)
                       for _ in range(n_inner)]
    p["enc_out"] = _init_linear(next(keys), hidden_size, hidden_size)
    # Latent heads
    p["fc_mu"] = _init_linear(next(keys), hidden_size, encoder_size)
    p["fc_var"] = _init_linear(next(keys), hidden_size, encoder_size)
    # Decoder: input (enc->enc, Swish), first hidden (enc->hid, Swish),
    #          n_inner x (hid->hid, Swish), output (hid->input_size)
    p["dec_in"] = _init_linear(next(keys), encoder_size, encoder_size)
    p["dec_h0"] = _init_linear(next(keys), encoder_size, hidden_size)
    p["dec_hidden"] = [_init_linear(next(keys), hidden_size, hidden_size)
                       for _ in range(n_inner)]
    p["dec_out"] = _init_linear(next(keys), hidden_size, input_size)
    return p


def pack_vde_params(params, input_size, hidden_size, encoder_size,
                    weight_dtype=jnp.bfloat16):
    """Zero-pad all weights/biases to lane-dense (128-multiple) shapes, fold the
    activation-free enc_out linear into the merged fc_mu/fc_var head, store
    weights in `weight_dtype` (bf16 for the MXU) and biases in f32, and flatten
    into the order the fused kernel consumes."""
    in_p = _pad_to(input_size, 128)
    hid_p = _pad_to(hidden_size, 128)
    enc_p = _pad_to(encoder_size, 128)

    def pad_wb(w, b, kp, npad):
        wp = jnp.zeros((kp, npad), jnp.float32).at[:w.shape[0], :w.shape[1]].set(w)
        bp = jnp.zeros((1, npad), jnp.float32).at[0, :b.shape[0]].set(b)
        return [wp.astype(weight_dtype), bp]    # bias stays f32

    flat = []
    # encoder stack kept in the kernel: enc_in + enc_hidden (all Swish)
    enc_layers = [params["enc_in"]] + list(params["enc_hidden"])
    k = in_p
    for (w, b) in enc_layers:
        flat += pad_wb(w, b, k, hid_p)
        k = hid_p

    # Fold enc_out (no activation) into the merged mu/log_var head (in f32):
    #   h @ W_out + b_out, then @ W_mu/var + b_mu/var
    #   == h @ (W_out @ W_mu/var) + (b_out @ W_mu/var + b_mu/var)
    w_out, b_out = params["enc_out"]
    wmu, bmu = params["fc_mu"]
    wvar, bvar = params["fc_var"]
    wmu_f = w_out @ wmu
    bmu_f = b_out @ wmu + bmu
    wvar_f = w_out @ wvar
    bvar_f = b_out @ wvar + bvar
    wm = jnp.zeros((hid_p, 2 * enc_p), jnp.float32)
    wm = wm.at[:hidden_size, :encoder_size].set(wmu_f)
    wm = wm.at[:hidden_size, enc_p:enc_p + encoder_size].set(wvar_f)
    bm = jnp.zeros((1, 2 * enc_p), jnp.float32)
    bm = bm.at[0, :encoder_size].set(bmu_f)
    bm = bm.at[0, enc_p:enc_p + encoder_size].set(bvar_f)
    flat += [wm.astype(weight_dtype), bm]

    # decoder stack: dec_in, dec_h0, dec_hidden..., dec_out
    dec_layers = ([params["dec_in"], params["dec_h0"]]
                  + list(params["dec_hidden"]) + [params["dec_out"]])
    dec_dims = ([(enc_p, enc_p), (enc_p, hid_p)]
                + [(hid_p, hid_p)] * len(params["dec_hidden"])
                + [(hid_p, in_p)])
    for (w, b), (kp, npad) in zip(dec_layers, dec_dims):
        flat += pad_wb(w, b, kp, npad)

    meta = dict(n_enc=len(enc_layers), n_dec=len(dec_layers),
                in_p=in_p, hid_p=hid_p, enc_p=enc_p,
                input_size=input_size, hidden_size=hidden_size,
                encoder_size=encoder_size)
    return flat, meta


# ----------------------------- fused forward wrapper -----------------------------

def vde_forward(flat_params, x, eps, *, meta):
    """Returns [recons, input, mu, log_var] just like VDE.forward.
    eps ~ N(0,1) of shape [batch, encoder_size] (passed in for determinism)."""
    batch, in_size = x.shape
    enc_size = eps.shape[1]
    in_p, hid_p, enc_p = meta["in_p"], meta["hid_p"], meta["enc_p"]
    n_enc, n_dec = meta["n_enc"], meta["n_dec"]

    # ---- batch tiling: big, sublane-aligned tiles; >= 2 grid steps for v7x ----
    max_tile, vmem_cap = _tpu_caps()
    tile_m = min(max_tile, _pad_to(batch, 8))
    m_pad = _pad_to(batch, tile_m)
    if m_pad // tile_m < 2:
        # guarantee >= 2 grid steps so the "parallel" axis can shard across the
        # two TensorCores on v7x (and pipeline on all generations)
        if tile_m >= 16:
            tile_m = _pad_to(tile_m // 2, 8)
            m_pad = _pad_to(batch, tile_m)
        if m_pad // tile_m < 2:
            m_pad = 2 * tile_m

    # TODO(synk): for large batch sizes keep x/eps pre-padded (or use 128-multiple
    # feature dims upstream) so these wrapper-side pad/slice copies are not paid
    # as separate XLA ops on every call.
    xp = jnp.pad(x.astype(jnp.bfloat16), ((0, m_pad - batch), (0, in_p - in_size)))
    ep = jnp.pad(eps.astype(jnp.float32), ((0, m_pad - batch), (0, enc_p - enc_size)))

    # Params: whole-array VMEM-resident operands (single-buffered, loaded once,
    # never re-fetched across the batch grid).
    param_specs = [pl.BlockSpec(memory_space=pltpu.MemorySpace.VMEM)
                   for _ in flat_params]
    in_specs = ([pl.BlockSpec((tile_m, in_p), lambda i: (i, 0)),
                 pl.BlockSpec((tile_m, enc_p), lambda i: (i, 0))] + param_specs)
    out_specs = (pl.BlockSpec((tile_m, in_p), lambda i: (i, 0)),
                 pl.BlockSpec((tile_m, enc_p), lambda i: (i, 0)),
                 pl.BlockSpec((tile_m, enc_p), lambda i: (i, 0)))
    out_shape = (jax.ShapeDtypeStruct((m_pad, in_p), jnp.float32),
                 jax.ShapeDtypeStruct((m_pad, enc_p), jnp.float32),
                 jax.ShapeDtypeStruct((m_pad, enc_p), jnp.float32))

    # ---- VMEM budget: resident params + double-buffered IO tiles + headroom ----
    param_bytes = sum(int(a.size) * a.dtype.itemsize for a in flat_params)
    io_bytes = 2 * tile_m * (2 * in_p + 4 * enc_p)           # x (bf16) + eps (f32), 2 bufs
    io_bytes += 2 * tile_m * 4 * (in_p + 2 * enc_p)          # f32 outputs, 2 bufs
    need = param_bytes + io_bytes + (4 << 20)                # activation/temp headroom
    vmem_limit = int(min(max(2 * need, 32 << 20),
                         max(vmem_cap - (16 << 20), 32 << 20),   # <= ~48 MiB on v7x
                         100 << 20))                             # <= ~100 MiB on v5e/v6e
    # TODO(synk): on v7x (64 MiB VMEM), once bf16 resident weights exceed ~40 MiB
    # (hidden_size >~ 1.5-2k) switch params from residency to a streamed weight
    # pipeline (extra "arbitrary" grid axis over layers / pltpu.emit_pipeline).

    # Advisory cost estimate for XLA scheduling around the custom call.
    flops = int(sum(2 * m_pad * w.shape[0] * w.shape[1] for w in flat_params[0::2]))
    transcendentals = int(m_pad * ((n_enc + n_dec) * hid_p + 2 * enc_p))
    bytes_accessed = int(param_bytes
                         + xp.size * xp.dtype.itemsize + ep.size * 4
                         + m_pad * 4 * (in_p + 2 * enc_p))

    kernel = functools.partial(_vde_fused_kernel,
                               n_enc=n_enc, n_dec=n_dec, enc_p=enc_p)
    recons, mu, log_var = pl.pallas_call(
        kernel,
        grid=(m_pad // tile_m,),
        in_specs=in_specs,
        out_specs=out_specs,
        out_shape=out_shape,
        compiler_params=pltpu.CompilerParams(
            dimension_semantics=("parallel",),
            vmem_limit_bytes=vmem_limit),
        cost_estimate=pl.CostEstimate(flops=flops,
                                      transcendentals=transcendentals,
                                      bytes_accessed=bytes_accessed),
    )(xp, ep, *flat_params)

    return [recons[:batch, :in_size], x,
            mu[:batch, :enc_size], log_var[:batch, :enc_size]]


# ----------------------------- reference (plain JAX, f32) -----------------------------

def _ref_forward(params, x, eps):
    def lin(h, wb, act=None):
        y = h @ wb[0] + wb[1]
        return y * jax.nn.sigmoid(y) if act == "swish" else y
    h = lin(x, params["enc_in"], "swish")
    for wb in params["enc_hidden"]:
        h = lin(h, wb, "swish")
    result = lin(h, params["enc_out"])
    mu = lin(result, params["fc_mu"])
    log_var = lin(result, params["fc_var"])
    z = eps * jnp.exp(0.5 * log_var) + mu
    d = lin(z, params["dec_in"], "swish")
    d = lin(d, params["dec_h0"], "swish")
    for wb in params["dec_hidden"]:
        d = lin(d, wb, "swish")
    return [lin(d, params["dec_out"]), x, mu, log_var]


# ----------------------------- main -----------------------------

if __name__ == "__main__":
    # Small, forward-consistent shapes.
    batch = 8
    input_size = 32
    hidden_size = 64
    encoder_size = 4
    hidden_layer_depth = 3

    key = jax.random.PRNGKey(0)
    k_params, k_x, k_eps = jax.random.split(key, 3)

    params = init_vde_params(k_params, input_size, hidden_size,
                             encoder_size, hidden_layer_depth)
    flat_params, meta = pack_vde_params(params, input_size, hidden_size, encoder_size)

    x = jax.random.normal(k_x, (batch, input_size), jnp.float32)
    eps = jax.random.normal(k_eps, (batch, encoder_size), jnp.float32)  # eps ~ N(0,1)

    fwd = jax.jit(functools.partial(vde_forward, meta=meta))
    outs = fwd(flat_params, x, eps)
    outs = [jax.block_until_ready(o) for o in outs]

    # Sanity check against a pure-JAX f32 reference (same eps -> same noise).
    # Tolerance is loosened to cover the intentional bf16 MXU operands and the
    # enc_out/head weight folding.
    refs = _ref_forward(params, x, eps)
    for o, r in zip(outs, refs):
        assert o.shape == r.shape
        assert jnp.allclose(o, r, atol=5e-2, rtol=5e-2), "mismatch vs reference"

    print("KERNEL_OK")
</pallas_src>

<mosaic_0001>
module attributes {stable_mosaic.version = 11 : i64} {
  func.func @_vde_fused_kernel(%arg0: i32, %arg1: memref<8x128xbf16, #tpu.memory_space<vmem>>, %arg2: memref<8x128xf32, #tpu.memory_space<vmem>>, %arg3: memref<128x128xbf16, #tpu.memory_space<vmem>>, %arg4: memref<1x128xf32, #tpu.memory_space<vmem>>, %arg5: memref<128x128xbf16, #tpu.memory_space<vmem>>, %arg6: memref<1x128xf32, #tpu.memory_space<vmem>>, %arg7: memref<128x128xbf16, #tpu.memory_space<vmem>>, %arg8: memref<1x128xf32, #tpu.memory_space<vmem>>, %arg9: memref<128x256xbf16, #tpu.memory_space<vmem>>, %arg10: memref<1x256xf32, #tpu.memory_space<vmem>>, %arg11: memref<128x128xbf16, #tpu.memory_space<vmem>>, %arg12: memref<1x128xf32, #tpu.memory_space<vmem>>, %arg13: memref<128x128xbf16, #tpu.memory_space<vmem>>, %arg14: memref<1x128xf32, #tpu.memory_space<vmem>>, %arg15: memref<128x128xbf16, #tpu.memory_space<vmem>>, %arg16: memref<1x128xf32, #tpu.memory_space<vmem>>, %arg17: memref<128x128xbf16, #tpu.memory_space<vmem>>, %arg18: memref<1x128xf32, #tpu.memory_space<vmem>>, %arg19: memref<128x128xbf16, #tpu.memory_space<vmem>>, %arg20: memref<1x128xf32, #tpu.memory_space<vmem>>, %arg21: memref<8x128xf32, #tpu.memory_space<vmem>>, %arg22: memref<8x128xf32, #tpu.memory_space<vmem>>, %arg23: memref<8x128xf32, #tpu.memory_space<vmem>>) attributes {dimension_semantics = [#tpu.dimension_semantics<parallel>], iteration_bounds = array<i64: 2>, scalar_prefetch = 0 : i64, scratch_operands = 0 : i64, tpu.core_type = #tpu.core_type<tc>, window_params = [{transform_indices = @transform_0, window_bounds = array<i64: 8, 128>}, {transform_indices = @transform_1, window_bounds = array<i64: 8, 128>}, {pipeline_mode = #tpu.pipeline_mode<synchronous>, transform_indices = @transform_2, window_bounds = array<i64: 128, 128>}, {pipeline_mode = #tpu.pipeline_mode<synchronous>, transform_indices = @transform_3, window_bounds = array<i64: 1, 128>}, {pipeline_mode = #tpu.pipeline_mode<synchronous>, transform_indices = @transform_4, window_bounds = array<i64: 128, 128>}, {pipeline_mode = #tpu.pipeline_mode<synchronous>, transform_indices = @transform_5, window_bounds = array<i64: 1, 128>}, {pipeline_mode = #tpu.pipeline_mode<synchronous>, transform_indices = @transform_6, window_bounds = array<i64: 128, 128>}, {pipeline_mode = #tpu.pipeline_mode<synchronous>, transform_indices = @transform_7, window_bounds = array<i64: 1, 128>}, {pipeline_mode = #tpu.pipeline_mode<synchronous>, transform_indices = @transform_8, window_bounds = array<i64: 128, 256>}, {pipeline_mode = #tpu.pipeline_mode<synchronous>, transform_indices = @transform_9, window_bounds = array<i64: 1, 256>}, {pipeline_mode = #tpu.pipeline_mode<synchronous>, transform_indices = @transform_10, window_bounds = array<i64: 128, 128>}, {pipeline_mode = #tpu.pipeline_mode<synchronous>, transform_indices = @transform_11, window_bounds = array<i64: 1, 128>}, {pipeline_mode = #tpu.pipeline_mode<synchronous>, transform_indices = @transform_12, window_bounds = array<i64: 128, 128>}, {pipeline_mode = #tpu.pipeline_mode<synchronous>, transform_indices = @transform_13, window_bounds = array<i64: 1, 128>}, {pipeline_mode = #tpu.pipeline_mode<synchronous>, transform_indices = @transform_14, window_bounds = array<i64: 128, 128>}, {pipeline_mode = #tpu.pipeline_mode<synchronous>, transform_indices = @transform_15, window_bounds = array<i64: 1, 128>}, {pipeline_mode = #tpu.pipeline_mode<synchronous>, transform_indices = @transform_16, window_bounds = array<i64: 128, 128>}, {pipeline_mode = #tpu.pipeline_mode<synchronous>, transform_indices = @transform_17, window_bounds = array<i64: 1, 128>}, {pipeline_mode = #tpu.pipeline_mode<synchronous>, transform_indices = @transform_18, window_bounds = array<i64: 128, 128>}, {pipeline_mode = #tpu.pipeline_mode<synchronous>, transform_indices = @transform_19, window_bounds = array<i64: 1, 128>}, {transform_indices = @transform_20, window_bounds = array<i64: 8, 128>}, {transform_indices = @transform_21, window_bounds = array<i64: 8, 128>}, {transform_indices = @transform_22, window_bounds = array<i64: 8, 128>}]} {
    %c0 = arith.constant 0 : index
    %c0_0 = arith.constant 0 : index
    %0 = vector.load %arg1[%c0, %c0_0] : memref<8x128xbf16, #tpu.memory_space<vmem>>, vector<8x128xbf16>
    %c0_1 = arith.constant 0 : index
    %c0_2 = arith.constant 0 : index
    %1 = vector.load %arg3[%c0_1, %c0_2] : memref<128x128xbf16, #tpu.memory_space<vmem>>, vector<128x128xbf16>
    %cst = arith.constant dense<0.000000e+00> : vector<8x128xf32>
    %2 = tpu.matmul %0, %1, %cst {dimension_numbers = #tpu.dot_dimension_numbers<[1], [0], [0], [1], [0, 0, 1, 1], [], []>} : vector<8x128xbf16>, vector<128x128xbf16>, vector<8x128xf32> -> vector<8x128xf32>
    %c0_3 = arith.constant 0 : index
    %c0_4 = arith.constant 0 : index
    %3 = vector.load %arg4[%c0_3, %c0_4] : memref<1x128xf32, #tpu.memory_space<vmem>>, vector<1x128xf32>
    %4 = vector.broadcast %3 : vector<1x128xf32> to vector<8x128xf32>
    %5 = arith.addf %2, %4 : vector<8x128xf32>
    %6 = arith.negf %5 : vector<8x128xf32>
    %7 = math.exp %6 : vector<8x128xf32>
    %cst_5 = arith.constant 1.000000e+00 : f32
    %8 = vector.broadcast %cst_5 : f32 to vector<8x128xf32>
    %9 = arith.addf %8, %7 : vector<8x128xf32>
    %10 = arith.divf %8, %9 : vector<8x128xf32>
    %11 = arith.mulf %5, %10 : vector<8x128xf32>
    %12 = arith.truncf %11 : vector<8x128xf32> to vector<8x128xbf16>
    %c0_6 = arith.constant 0 : index
    %c0_7 = arith.constant 0 : index
    %13 = vector.load %arg5[%c0_6, %c0_7] : memref<128x128xbf16, #tpu.memory_space<vmem>>, vector<128x128xbf16>
    %cst_8 = arith.constant dense<0.000000e+00> : vector<8x128xf32>
    %14 = tpu.matmul %12, %13, %cst_8 {dimension_numbers = #tpu.dot_dimension_numbers<[1], [0], [0], [1], [0, 0, 1, 1], [], []>} : vector<8x128xbf16>, vector<128x128xbf16>, vector<8x128xf32> -> vector<8x128xf32>
    %c0_9 = arith.constant 0 : index
    %c0_10 = arith.constant 0 : index
    %15 = vector.load %arg6[%c0_9, %c0_10] : memref<1x128xf32, #tpu.memory_space<vmem>>, vector<1x128xf32>
    %16 = vector.broadcast %15 : vector<1x128xf32> to vector<8x128xf32>
    %17 = arith.addf %14, %16 : vector<8x128xf32>
    %18 = arith.negf %17 : vector<8x128xf32>
    %19 = math.exp %18 : vector<8x128xf32>
    %cst_11 = arith.constant 1.000000e+00 : f32
    %20 = vector.broadcast %cst_11 : f32 to vector<8x128xf32>
    %21 = arith.addf %20, %19 : vector<8x128xf32>
    %22 = arith.divf %20, %21 : vector<8x128xf32>
    %23 = arith.mulf %17, %22 : vector<8x128xf32>
    %24 = arith.truncf %23 : vector<8x128xf32> to vector<8x128xbf16>
    %c0_12 = arith.constant 0 : index
    %c0_13 = arith.constant 0 : index
    %25 = vector.load %arg7[%c0_12, %c0_13] : memref<128x128xbf16, #tpu.memory_space<vmem>>, vector<128x128xbf16>
    %cst_14 = arith.constant dense<0.000000e+00> : vector<8x128xf32>
    %26 = tpu.matmul %24, %25, %cst_14 {dimension_numbers = #tpu.dot_dimension_numbers<[1], [0], [0], [1], [0, 0, 1, 1], [], []>} : vector<8x128xbf16>, vector<128x128xbf16>, vector<8x128xf32> -> vector<8x128xf32>
    %c0_15 = arith.constant 0 : index
    %c0_16 = arith.constant 0 : index
    %27 = vector.load %arg8[%c0_15, %c0_16] : memref<1x128xf32, #tpu.memory_space<vmem>>, vector<1x128xf32>
    %28 = vector.broadcast %27 : vector<1x128xf32> to vector<8x128xf32>
    %29 = arith.addf %26, %28 : vector<8x128xf32>
    %30 = arith.negf %29 : vector<8x128xf32>
    %31 = math.exp %30 : vector<8x128xf32>
    %cst_17 = arith.constant 1.000000e+00 : f32
    %32 = vector.broadcast %cst_17 : f32 to vector<8x128xf32>
    %33 = arith.addf %32, %31 : vector<8x128xf32>
    %34 = arith.divf %32, %33 : vector<8x128xf32>
    %35 = arith.mulf %29, %34 : vector<8x128xf32>
    %36 = arith.truncf %35 : vector<8x128xf32> to vector<8x128xbf16>
    %c0_18 = arith.constant 0 : index
    %c0_19 = arith.constant 0 : index
    %37 = vector.load %arg9[%c0_18, %c0_19] : memref<128x256xbf16, #tpu.memory_space<vmem>>, vector<128x256xbf16>
    %cst_20 = arith.constant dense<0.000000e+00> : vector<8x256xf32>
    %38 = tpu.matmul %36, %37, %cst_20 {dimension_numbers = #tpu.dot_dimension_numbers<[1], [0], [0], [1], [0, 0, 1, 1], [], []>} : vector<8x128xbf16>, vector<128x256xbf16>, vector<8x256xf32> -> vector<8x256xf32>
    %c0_21 = arith.constant 0 : index
    %c0_22 = arith.constant 0 : index
    %39 = vector.load %arg10[%c0_21, %c0_22] : memref<1x256xf32, #tpu.memory_space<vmem>>, vector<1x256xf32>
    %40 = vector.broadcast %39 : vector<1x256xf32> to vector<8x256xf32>
    %41 = arith.addf %38, %40 : vector<8x256xf32>
    %42 = vector.extract_strided_slice %41 {offsets = [0, 0], sizes = [8, 128], strides = [1, 1]} : vector<8x256xf32> to vector<8x128xf32>
    %43 = vector.extract_strided_slice %41 {offsets = [0, 128], sizes = [8, 128], strides = [1, 1]} : vector<8x256xf32> to vector<8x128xf32>
    %c0_23 = arith.constant 0 : index
    %c0_24 = arith.constant 0 : index
    %44 = vector.load %arg22[%c0_23, %c0_24] : memref<8x128xf32, #tpu.memory_space<vmem>>, vector<8x128xf32>
    tpu.vector_store %arg22[%c0_23, %c0_24], %42 {strides = array<i32>} : memref<8x128xf32, #tpu.memory_space<vmem>>, vector<8x128xf32>,
    %c0_25 = arith.constant 0 : index
    %c0_26 = arith.constant 0 : index
    %45 = vector.load %arg23[%c0_25, %c0_26] : memref<8x128xf32, #tpu.memory_space<vmem>>, vector<8x128xf32>
    tpu.vector_store %arg23[%c0_25, %c0_26], %43 {strides = array<i32>} : memref<8x128xf32, #tpu.memory_space<vmem>>, vector<8x128xf32>,
    %c0_27 = arith.constant 0 : index
    %c0_28 = arith.constant 0 : index
    %46 = vector.load %arg2[%c0_27, %c0_28] : memref<8x128xf32, #tpu.memory_space<vmem>>, vector<8x128xf32>
    %cst_29 = arith.constant 5.000000e-01 : f32
    %47 = vector.broadcast %cst_29 : f32 to vector<8x128xf32>
    %48 = arith.mulf %47, %43 : vector<8x128xf32>
    %49 = math.exp %48 : vector<8x128xf32>
    %50 = arith.mulf %46, %49 : vector<8x128xf32>
    %51 = arith.addf %50, %42 : vector<8x128xf32>
    %52 = arith.truncf %51 : vector<8x128xf32> to vector<8x128xbf16>
    %c0_30 = arith.constant 0 : index
    %c0_31 = arith.constant 0 : index
    %53 = vector.load %arg11[%c0_30, %c0_31] : memref<128x128xbf16, #tpu.memory_space<vmem>>, vector<128x128xbf16>
    %cst_32 = arith.constant dense<0.000000e+00> : vector<8x128xf32>
    %54 = tpu.matmul %52, %53, %cst_32 {dimension_numbers = #tpu.dot_dimension_numbers<[1], [0], [0], [1], [0, 0, 1, 1], [], []>} : vector<8x128xbf16>, vector<128x128xbf16>, vector<8x128xf32> -> vector<8x128xf32>
    %c0_33 = arith.constant 0 : index
    %c0_34 = arith.constant 0 : index
    %55 = vector.load %arg12[%c0_33, %c0_34] : memref<1x128xf32, #tpu.memory_space<vmem>>, vector<1x128xf32>
    %56 = vector.broadcast %55 : vector<1x128xf32> to vector<8x128xf32>
    %57 = arith.addf %54, %56 : vector<8x128xf32>
    %58 = arith.negf %57 : vector<8x128xf32>
    %59 = math.exp %58 : vector<8x128xf32>
    %cst_35 = arith.constant 1.000000e+00 : f32
    %60 = vector.broadcast %cst_35 : f32 to vector<8x128xf32>
    %61 = arith.addf %60, %59 : vector<8x128xf32>
    %62 = arith.divf %60, %61 : vector<8x128xf32>
    %63 = arith.mulf %57, %62 : vector<8x128xf32>
    %64 = arith.truncf %63 : vector<8x128xf32> to vector<8x128xbf16>
    %c0_36 = arith.constant 0 : index
    %c0_37 = arith.constant 0 : index
    %65 = vector.load %arg13[%c0_36, %c0_37] : memref<128x128xbf16, #tpu.memory_space<vmem>>, vector<128x128xbf16>
    %cst_38 = arith.constant dense<0.000000e+00> : vector<8x128xf32>
    %66 = tpu.matmul %64, %65, %cst_38 {dimension_numbers = #tpu.dot_dimension_numbers<[1], [0], [0], [1], [0, 0, 1, 1], [], []>} : vector<8x128xbf16>, vector<128x128xbf16>, vector<8x128xf32> -> vector<8x128xf32>
    %c0_39 = arith.constant 0 : index
    %c0_40 = arith.constant 0 : index
    %67 = vector.load %arg14[%c0_39, %c0_40] : memref<1x128xf32, #tpu.memory_space<vmem>>, vector<1x128xf32>
    %68 = vector.broadcast %67 : vector<1x128xf32> to vector<8x128xf32>
    %69 = arith.addf %66, %68 : vector<8x128xf32>
    %70 = arith.negf %69 : vector<8x128xf32>
    %71 = math.exp %70 : vector<8x128xf32>
    %cst_41 = arith.constant 1.000000e+00 : f32
    %72 = vector.broadcast %cst_41 : f32 to vector<8x128xf32>
    %73 = arith.addf %72, %71 : vector<8x128xf32>
    %74 = arith.divf %72, %73 : vector<8x128xf32>
    %75 = arith.mulf %69, %74 : vector<8x128xf32>
    %76 = arith.truncf %75 : vector<8x128xf32> to vector<8x128xbf16>
    %c0_42 = arith.constant 0 : index
    %c0_43 = arith.constant 0 : index
    %77 = vector.load %arg15[%c0_42, %c0_43] : memref<128x128xbf16, #tpu.memory_space<vmem>>, vector<128x128xbf16>
    %cst_44 = arith.constant dense<0.000000e+00> : vector<8x128xf32>
    %78 = tpu.matmul %76, %77, %cst_44 {dimension_numbers = #tpu.dot_dimension_numbers<[1], [0], [0], [1], [0, 0, 1, 1], [], []>} : vector<8x128xbf16>, vector<128x128xbf16>, vector<8x128xf32> -> vector<8x128xf32>
    %c0_45 = arith.constant 0 : index
    %c0_46 = arith.constant 0 : index
    %79 = vector.load %arg16[%c0_45, %c0_46] : memref<1x128xf32, #tpu.memory_space<vmem>>, vector<1x128xf32>
    %80 = vector.broadcast %79 : vector<1x128xf32> to vector<8x128xf32>
    %81 = arith.addf %78, %80 : vector<8x128xf32>
    %82 = arith.negf %81 : vector<8x128xf32>
    %83 = math.exp %82 : vector<8x128xf32>
    %cst_47 = arith.constant 1.000000e+00 : f32
    %84 = vector.broadcast %cst_47 : f32 to vector<8x128xf32>
    %85 = arith.addf %84, %83 : vector<8x128xf32>
    %86 = arith.divf %84, %85 : vector<8x128xf32>
    %87 = arith.mulf %81, %86 : vector<8x128xf32>
    %88 = arith.truncf %87 : vector<8x128xf32> to vector<8x128xbf16>
    %c0_48 = arith.constant 0 : index
    %c0_49 = arith.constant 0 : index
    %89 = vector.load %arg17[%c0_48, %c0_49] : memref<128x128xbf16, #tpu.memory_space<vmem>>, vector<128x128xbf16>
    %cst_50 = arith.constant dense<0.000000e+00> : vector<8x128xf32>
    %90 = tpu.matmul %88, %89, %cst_50 {dimension_numbers = #tpu.dot_dimension_numbers<[1], [0], [0], [1], [0, 0, 1, 1], [], []>} : vector<8x128xbf16>, vector<128x128xbf16>, vector<8x128xf32> -> vector<8x128xf32>
    %c0_51 = arith.constant 0 : index
    %c0_52 = arith.constant 0 : index
    %91 = vector.load %arg18[%c0_51, %c0_52] : memref<1x128xf32, #tpu.memory_space<vmem>>, vector<1x128xf32>
    %92 = vector.broadcast %91 : vector<1x128xf32> to vector<8x128xf32>
    %93 = arith.addf %90, %92 : vector<8x128xf32>
    %94 = arith.negf %93 : vector<8x128xf32>
    %95 = math.exp %94 : vector<8x128xf32>
    %cst_53 = arith.constant 1.000000e+00 : f32
    %96 = vector.broadcast %cst_53 : f32 to vector<8x128xf32>
    %97 = arith.addf %96, %95 : vector<8x128xf32>
    %98 = arith.divf %96, %97 : vector<8x128xf32>
    %99 = arith.mulf %93, %98 : vector<8x128xf32>
    %100 = arith.truncf %99 : vector<8x128xf32> to vector<8x128xbf16>
    %c0_54 = arith.constant 0 : index
    %c0_55 = arith.constant 0 : index
    %101 = vector.load %arg19[%c0_54, %c0_55] : memref<128x128xbf16, #tpu.memory_space<vmem>>, vector<128x128xbf16>
    %cst_56 = arith.constant dense<0.000000e+00> : vector<8x128xf32>
    %102 = tpu.matmul %100, %101, %cst_56 {dimension_numbers = #tpu.dot_dimension_numbers<[1], [0], [0], [1], [0, 0, 1, 1], [], []>} : vector<8x128xbf16>, vector<128x128xbf16>, vector<8x128xf32> -> vector<8x128xf32>
    %c0_57 = arith.constant 0 : index
    %c0_58 = arith.constant 0 : index
    %103 = vector.load %arg20[%c0_57, %c0_58] : memref<1x128xf32, #tpu.memory_space<vmem>>, vector<1x128xf32>
    %104 = vector.broadcast %103 : vector<1x128xf32> to vector<8x128xf32>
    %105 = arith.addf %102, %104 : vector<8x128xf32>
    %c0_59 = arith.constant 0 : index
    %c0_60 = arith.constant 0 : index
    %106 = vector.load %arg21[%c0_59, %c0_60] : memref<8x128xf32, #tpu.memory_space<vmem>>, vector<8x128xf32>
    tpu.vector_store %arg21[%c0_59, %c0_60], %105 {strides = array<i32>} : memref<8x128xf32, #tpu.memory_space<vmem>>, vector<8x128xf32>,
    return
  }
  func.func @transform_0(%arg0: i32) -> (i32, i32) {
    %c0_i32 = arith.constant 0 : i32
    %c0_i32_0 = arith.constant 0 : i32
    return %arg0, %c0_i32 : i32, i32
  }
  func.func @transform_1(%arg0: i32) -> (i32, i32) {
    %c0_i32 = arith.constant 0 : i32
    %c0_i32_0 = arith.constant 0 : i32
    return %arg0, %c0_i32 : i32, i32
  }
  func.func @transform_2(%arg0: i32) -> (i32, i32) {
    %c0_i32 = arith.constant 0 : i32
    %c0_i32_0 = arith.constant 0 : i32
    %c0_i32_1 = arith.constant 0 : i32
    return %c0_i32, %c0_i32_0 : i32, i32
  }
  func.func @transform_3(%arg0: i32) -> (i32, i32) {
    %c0_i32 = arith.constant 0 : i32
    %c0_i32_0 = arith.constant 0 : i32
    %c0_i32_1 = arith.constant 0 : i32
    return %c0_i32, %c0_i32_0 : i32, i32
  }
  func.func @transform_4(%arg0: i32) -> (i32, i32) {
    %c0_i32 = arith.constant 0 : i32
    %c0_i32_0 = arith.constant 0 : i32
    %c0_i32_1 = arith.constant 0 : i32
    return %c0_i32, %c0_i32_0 : i32, i32
  }
  func.func @transform_5(%arg0: i32) -> (i32, i32) {
    %c0_i32 = arith.constant 0 : i32
    %c0_i32_0 = arith.constant 0 : i32
    %c0_i32_1 = arith.constant 0 : i32
    return %c0_i32, %c0_i32_0 : i32, i32
  }
  func.func @transform_6(%arg0: i32) -> (i32, i32) {
    %c0_i32 = arith.constant 0 : i32
    %c0_i32_0 = arith.constant 0 : i32
    %c0_i32_1 = arith.constant 0 : i32
    return %c0_i32, %c0_i32_0 : i32, i32
  }
  func.func @transform_7(%arg0: i32) -> (i32, i32) {
    %c0_i32 = arith.constant 0 : i32
    %c0_i32_0 = arith.constant 0 : i32
    %c0_i32_1 = arith.constant 0 : i32
    return %c0_i32, %c0_i32_0 : i32, i32
  }
  func.func @transform_8(%arg0: i32) -> (i32, i32) {
    %c0_i32 = arith.constant 0 : i32
    %c0_i32_0 = arith.constant 0 : i32
    %c0_i32_1 = arith.constant 0 : i32
    return %c0_i32, %c0_i32_0 : i32, i32
  }
  func.func @transform_9(%arg0: i32) -> (i32, i32) {
    %c0_i32 = arith.constant 0 : i32
    %c0_i32_0 = arith.constant 0 : i32
    %c0_i32_1 = arith.constant 0 : i32
    return %c0_i32, %c0_i32_0 : i32, i32
  }
  func.func @transform_10(%arg0: i32) -> (i32, i32) {
    %c0_i32 = arith.constant 0 : i32
    %c0_i32_0 = arith.constant 0 : i32
    %c0_i32_1 = arith.constant 0 : i32
    return %c0_i32, %c0_i32_0 : i32, i32
  }
  func.func @transform_11(%arg0: i32) -> (i32, i32) {
    %c0_i32 = arith.constant 0 : i32
    %c0_i32_0 = arith.constant 0 : i32
    %c0_i32_1 = arith.constant 0 : i32
    return %c0_i32, %c0_i32_0 : i32, i32
  }
  func.func @transform_12(%arg0: i32) -> (i32, i32) {
    %c0_i32 = arith.constant 0 : i32
    %c0_i32_0 = arith.constant 0 : i32
    %c0_i32_1 = arith.constant 0 : i32
    return %c0_i32, %c0_i32_0 : i32, i32
  }
  func.func @transform_13(%arg0: i32) -> (i32, i32) {
    %c0_i32 = arith.constant 0 : i32
    %c0_i32_0 = arith.constant 0 : i32
    %c0_i32_1 = arith.constant 0 : i32
    return %c0_i32, %c0_i32_0 : i32, i32
  }
  func.func @transform_14(%arg0: i32) -> (i32, i32) {
    %c0_i32 = arith.constant 0 : i32
    %c0_i32_0 = arith.constant 0 : i32
    %c0_i32_1 = arith.constant 0 : i32
    return %c0_i32, %c0_i32_0 : i32, i32
  }
  func.func @transform_15(%arg0: i32) -> (i32, i32) {
    %c0_i32 = arith.constant 0 : i32
    %c0_i32_0 = arith.constant 0 : i32
    %c0_i32_1 = arith.constant 0 : i32
    return %c0_i32, %c0_i32_0 : i32, i32
  }
  func.func @transform_16(%arg0: i32) -> (i32, i32) {
    %c0_i32 = arith.constant 0 : i32
    %c0_i32_0 = arith.constant 0 : i32
    %c0_i32_1 = arith.constant 0 : i32
    return %c0_i32, %c0_i32_0 : i32, i32
  }
  func.func @transform_17(%arg0: i32) -> (i32, i32) {
    %c0_i32 = arith.constant 0 : i32
    %c0_i32_0 = arith.constant 0 : i32
    %c0_i32_1 = arith.constant 0 : i32
    return %c0_i32, %c0_i32_0 : i32, i32
  }
  func.func @transform_18(%arg0: i32) -> (i32, i32) {
    %c0_i32 = arith.constant 0 : i32
    %c0_i32_0 = arith.constant 0 : i32
    %c0_i32_1 = arith.constant 0 : i32
    return %c0_i32, %c0_i32_0 : i32, i32
  }
  func.func @transform_19(%arg0: i32) -> (i32, i32) {
    %c0_i32 = arith.constant 0 : i32
    %c0_i32_0 = arith.constant 0 : i32
    %c0_i32_1 = arith.constant 0 : i32
    return %c0_i32, %c0_i32_0 : i32, i32
  }
  func.func @transform_20(%arg0: i32) -> (i32, i32) {
    %c0_i32 = arith.constant 0 : i32
    %c0_i32_0 = arith.constant 0 : i32
    return %arg0, %c0_i32 : i32, i32
  }
  func.func @transform_21(%arg0: i32) -> (i32, i32) {
    %c0_i32 = arith.constant 0 : i32
    %c0_i32_0 = arith.constant 0 : i32
    return %arg0, %c0_i32 : i32, i32
  }
  func.func @transform_22(%arg0: i32) -> (i32, i32) {
    %c0_i32 = arith.constant 0 : i32
    %c0_i32_0 = arith.constant 0 : i32
    return %arg0, %c0_i32 : i32, i32
  }
}

</mosaic_0001>

<llo_original>
// kernel: vde_forward.1
$region0: #{vde_forward.1}
  #allocation0 [shape = 'u32[]', space=smem, size = 0x4, offset = 0x4, fixed_abs, tag = 'smem constant byte address 0x4 - core index']
  #allocation1 [shape = 'u32[144,128]{1,0:T(1,128)}', space=vmem, size = 0x12000, scoped, tag = 'internal scratch']
  %s0 = inlined_call_operand.vmem [shape: bf16[16,128], index: 0, kind: input, shape index: {}]
  %s1 = inlined_call_operand.vmem [shape: f32[16,128], index: 1, kind: input, shape index: {}]
  %s2 = inlined_call_operand.vmem [shape: bf16[128,128], index: 2, kind: input, shape index: {}]
  %s3 = inlined_call_operand.vmem [shape: f32[1,128], index: 3, kind: input, shape index: {}]
  %s4 = inlined_call_operand.hbm [shape: bf16[128,128], index: 4, kind: input, shape index: {}]
  %s5 = inlined_call_operand.vmem [shape: f32[1,128], index: 5, kind: input, shape index: {}]
  %s6 = inlined_call_operand.hbm [shape: bf16[128,128], index: 6, kind: input, shape index: {}]
  %s7 = inlined_call_operand.vmem [shape: f32[1,128], index: 7, kind: input, shape index: {}]
  %s8 = inlined_call_operand.hbm [shape: bf16[128,256], index: 8, kind: input, shape index: {}]
  %s9 = inlined_call_operand.vmem [shape: f32[1,256], index: 9, kind: input, shape index: {}]
  %s10 = inlined_call_operand.hbm [shape: bf16[128,128], index: 10, kind: input, shape index: {}]
  %s11 = inlined_call_operand.vmem [shape: f32[1,128], index: 11, kind: input, shape index: {}]
  %s12 = inlined_call_operand.hbm [shape: bf16[128,128], index: 12, kind: input, shape index: {}]
  %s13 = inlined_call_operand.vmem [shape: f32[1,128], index: 13, kind: input, shape index: {}]
  %s14 = inlined_call_operand.hbm [shape: bf16[128,128], index: 14, kind: input, shape index: {}]
  %s15 = inlined_call_operand.vmem [shape: f32[1,128], index: 15, kind: input, shape index: {}]
  %s16 = inlined_call_operand.hbm [shape: bf16[128,128], index: 16, kind: input, shape index: {}]
  %s17 = inlined_call_operand.vmem [shape: f32[1,128], index: 17, kind: input, shape index: {}]
  %s18 = inlined_call_operand.hbm [shape: bf16[128,128], index: 18, kind: input, shape index: {}]
  %s19 = inlined_call_operand.vmem [shape: f32[1,128], index: 19, kind: input, shape index: {}]
  %s20 = inlined_call_operand.vmem [shape: f32[16,128], index: 20, kind: output, shape index: {0}]
  %s21 = inlined_call_operand.vmem [shape: f32[16,128], index: 21, kind: output, shape index: {1}]
  %s22 = inlined_call_operand.vmem [shape: f32[16,128], index: 22, kind: output, shape index: {2}]
  %23 = xla_tuple %s20, %s21, %s22
  %s24 = sld [smem:[#allocation0]]
  $region161: #{vde_forward.1} parent=0
    _
  %s26 = ssub.s32 1, %s24
  %s27 = scalar_select 0, %s26, %s24
  $region1: #{vde_forward.1} parent=0
    #allocation2 [shape = 'u8[32768]{0}', space=vmem, size = 0x8000, scoped, tag = 'input window, operand 4, single buffered']
    #allocation3 [shape = 's32[2]{0}', space=sflag, size = 0x8, scoped, tag = 'scoped memory for vde_forward.1']
    #allocation4 [shape = 'u8[32768]{0}', space=vmem, size = 0x8000, scoped, tag = 'input window, operand 6, single buffered']
    #allocation5 [shape = 's32[1]{0}', space=sflag, size = 0x4, scoped, tag = 'scoped memory for vde_forward.1']
    #allocation6 [shape = 'u8[65536]{0}', space=vmem, size = 0x10000, scoped, tag = 'input window, operand 8, single buffered']
    #allocation7 [shape = 'u8[32768]{0}', space=vmem, size = 0x8000, scoped, tag = 'input window, operand 10, single buffered']
    #allocation8 [shape = 's32[1]{0}', space=sflag, size = 0x4, scoped, tag = 'scoped memory for vde_forward.1']
    #allocation9 [shape = 'u8[32768]{0}', space=vmem, size = 0x8000, scoped, tag = 'input window, operand 12, single buffered']
    #allocation10 [shape = 'u8[32768]{0}', space=vmem, size = 0x8000, scoped, tag = 'input window, operand 14, single buffered']
    #allocation11 [shape = 's32[1]{0}', space=sflag, size = 0x4, scoped, tag = 'scoped memory for vde_forward.1']
    #allocation12 [shape = 'u8[32768]{0}', space=vmem, size = 0x8000, scoped, tag = 'input window, operand 16, single buffered']
    #allocation13 [shape = 'u8[32768]{0}', space=vmem, size = 0x8000, scoped, tag = 'input window, operand 18, single buffered']
    #allocation14 [shape = 's32[1]{0}', space=sflag, size = 0x4, scoped, tag = 'scoped memory for vde_forward.1']
    %28 = vsyncpa [#allocation3], 0
    %29 = vsyncpa [#allocation5], 0
    %30 = vsyncpa [#allocation8], 0
    %31 = vsyncpa [#allocation11], 0
    %32 = vsyncpa [#allocation14], 0
    loop: start=0, step=1, limit=4
    $region2: #{vde_forward.1} parent=1 // loop_pre_header
      _
    $region3: #{vde_forward.1} parent=1 // loop_header
      %s34 = sphi 0, %s38
      %p35 = scmp.ge.s32.totalorder %s34, 4
      %s44 = sphi 0, %s46
      %s47 = sphi 0, %s44
      %s48 = sphi 0, %s47
      %s64 = sphi 0, %s48
      %s70 = sphi 0, %s72
      %s73 = sphi 0, %s70
      %s74 = sphi 0, %s73
      %s90 = sphi 0, %s74
      %s94 = sphi 0, %s94
      %s96 = sphi 0, %s94
      %s97 = sphi 0, %s96
      %s111 = sphi 0, %s97
      %s115 = sphi 0, %s115
      %s117 = sphi 0, %s115
      %s118 = sphi 0, %s117
      %s132 = sphi 0, %s118
      %s136 = sphi 0, %s136
      %s138 = sphi 0, %s136
      %s139 = sphi 0, %s138
      %s153 = sphi 0, %s139
      %s157 = sphi 0, %s157
      %s159 = sphi 0, %s157
      %s160 = sphi 0, %s159
      %s174 = sphi 0, %s160
      %s178 = sphi 0, %s178
      %s180 = sphi 0, %s178
      %s181 = sphi 0, %s180
      %s195 = sphi 0, %s181
      %s199 = sphi 0, %s199
      %s201 = sphi 0, %s199
      %s202 = sphi 0, %s201
      %s216 = sphi 0, %s202
      %s220 = sphi 0, %s220
      %s222 = sphi 0, %s220
      %s223 = sphi 0, %s222
      %s237 = sphi 0, %s223
      %s241 = sphi 0, %s241
      %s243 = sphi 0, %s241
      %s244 = sphi 0, %s243
      %s258 = sphi 0, %s244
      %s262 = sphi 0, %s262
      %s264 = sphi 0, %s262
      %s265 = sphi 0, %s264
      %s279 = sphi 0, %s265
      %s283 = sphi 0, %s283
      %s285 = sphi 0, %s283
      %s286 = sphi 0, %s285
      %s300 = sphi 0, %s286
      %s304 = sphi 0, %s304
      %s306 = sphi 0, %s304
      %s307 = sphi 0, %s306
      %s321 = sphi 0, %s307
      %s325 = sphi 0, %s325
      %s327 = sphi 0, %s325
      %s328 = sphi 0, %s327
      %s342 = sphi 0, %s328
      %s346 = sphi 0, %s346
      %s348 = sphi 0, %s346
      %s349 = sphi 0, %s348
      %s363 = sphi 0, %s349
      %s367 = sphi 0, %s367
      %s369 = sphi 0, %s367
      %s370 = sphi 0, %s369
      %s384 = sphi 0, %s370
      %s388 = sphi 0, %s388
      %s390 = sphi 0, %s388
      %s391 = sphi 0, %s390
      %s405 = sphi 0, %s391
      %s409 = sphi 0, %s409
      %s411 = sphi 0, %s409
      %s412 = sphi 0, %s411
      %s426 = sphi 0, %s412
      %s430 = sphi 0, %s430
      %s432 = sphi 0, %s430
      %s433 = sphi 0, %s432
      %s447 = sphi 0, %s433
      %s451 = sphi 0, %s451
      %s453 = sphi 0, %s451
      %s454 = sphi 0, %s453
      %s468 = sphi 0, %s454
      %s474 = sphi 0, %s476
      %s477 = sphi 0, %s474
      %s478 = sphi 0, %s477
      %s494 = sphi 0, %s478
      %s500 = sphi 0, %s502
      %s503 = sphi 0, %s500
      %s504 = sphi 0, %s503
      %s520 = sphi 0, %s504
      %s526 = sphi 0, %s528
      %s529 = sphi 0, %s526
      %s530 = sphi 0, %s529
      %s546 = sphi 0, %s530
    $region4: #{vde_forward.1} parent=1 // loop_header_branch
      %37 = sbr.rel (%p35) target = $region8
    $region5: #{vde_forward.1} parent=1 // loop_body
      %s39 = ssub.s32 %s34, 1
      %s40 = ssub.s32 %s34, 2
      %s41 = sadd.s32 %s34, 1
      %s42 = ssub.s32 %s34, %s41
      %p43 = scmp.eq.s32.totalorder %s42, 0
      %s45 = sadd.s32 %s44, 1
      %s46 = scalar_select %p43, %s44, %s45
      %p49 = pneg %p43
      %p50 = scmp.eq.s32.totalorder %s34, 1
      %p51 = por %p49, %p50
      %p52 = scmp.ne.s32.totalorder %s44, %s47
      %p53 = scmp.eq.s32.totalorder %s34, 0
      %p54 = por %p52, %p53
      %p55 = scmp.ne.s32.totalorder %s44, %s47
      %p56 = scmp.eq.s32.totalorder %s39, 1
      %p57 = por %p55, %p56
      %p58 = scmp.ne.s32.totalorder %s47, %s48
      %p59 = scmp.eq.s32.totalorder %s39, 0
      %p60 = por %p58, %p59
      %p61 = scmp.ne.s32.totalorder %s47, %s48
      %p62 = scmp.eq.s32.totalorder %s40, 1
      %p63 = por %p61, %p62
      %p65 = scmp.ne.s32.totalorder %s48, %s64
      %p66 = scmp.eq.s32.totalorder %s40, 0
      %p67 = por %p65, %p66
      %s68 = ssub.s32 %s34, %s41
      %p69 = scmp.eq.s32.totalorder %s68, 0
      %s71 = sadd.s32 %s70, 1
      %s72 = scalar_select %p69, %s70, %s71
      %p75 = pneg %p69
      %p76 = scmp.eq.s32.totalorder %s34, 1
      %p77 = por %p75, %p76
      %p78 = scmp.ne.s32.totalorder %s70, %s73
      %p79 = scmp.eq.s32.totalorder %s34, 0
      %p80 = por %p78, %p79
      %p81 = scmp.ne.s32.totalorder %s70, %s73
      %p82 = scmp.eq.s32.totalorder %s39, 1
      %p83 = por %p81, %p82
      %p84 = scmp.ne.s32.totalorder %s73, %s74
      %p85 = scmp.eq.s32.totalorder %s39, 0
      %p86 = por %p84, %p85
      %p87 = scmp.ne.s32.totalorder %s73, %s74
      %p88 = scmp.eq.s32.totalorder %s40, 1
      %p89 = por %p87, %p88
      %p91 = scmp.ne.s32.totalorder %s74, %s90
      %p92 = scmp.eq.s32.totalorder %s40, 0
      %p93 = por %p91, %p92
      %s95 = sadd.s32 %s94, 1
      %p98 = scmp.eq.s32.totalorder %s34, 1
      %p99 = scmp.ne.s32.totalorder %s94, %s96
      %p100 = scmp.eq.s32.totalorder %s34, 0
      %p101 = por %p99, %p100
      %p102 = scmp.ne.s32.totalorder %s94, %s96
      %p103 = scmp.eq.s32.totalorder %s39, 1
      %p104 = por %p102, %p103
      %p105 = scmp.ne.s32.totalorder %s96, %s97
      %p106 = scmp.eq.s32.totalorder %s39, 0
      %p107 = por %p105, %p106
      %p108 = scmp.ne.s32.totalorder %s96, %s97
      %p109 = scmp.eq.s32.totalorder %s40, 1
      %p110 = por %p108, %p109
      %p112 = scmp.ne.s32.totalorder %s97, %s111
      %p113 = scmp.eq.s32.totalorder %s40, 0
      %p114 = por %p112, %p113
      %s116 = sadd.s32 %s115, 1
      %p119 = scmp.eq.s32.totalorder %s34, 1
      %p120 = scmp.ne.s32.totalorder %s115, %s117
      %p121 = scmp.eq.s32.totalorder %s34, 0
      %p122 = por %p120, %p121
      %p123 = scmp.ne.s32.totalorder %s115, %s117
      %p124 = scmp.eq.s32.totalorder %s39, 1
      %p125 = por %p123, %p124
      %p126 = scmp.ne.s32.totalorder %s117, %s118
      %p127 = scmp.eq.s32.totalorder %s39, 0
      %p128 = por %p126, %p127
      %p129 = scmp.ne.s32.totalorder %s117, %s118
      %p130 = scmp.eq.s32.totalorder %s40, 1
      %p131 = por %p129, %p130
      %p133 = scmp.ne.s32.totalorder %s118, %s132
      %p134 = scmp.eq.s32.totalorder %s40, 0
      %p135 = por %p133, %p134
      %s137 = sadd.s32 %s136, 1
      %p140 = scmp.eq.s32.totalorder %s34, 1
      %p141 = scmp.ne.s32.totalorder %s136, %s138
      %p142 = scmp.eq.s32.totalorder %s34, 0
      %p143 = por %p141, %p142
      %p144 = scmp.ne.s32.totalorder %s136, %s138
      %p145 = scmp.eq.s32.totalorder %s39, 1
      %p146 = por %p144, %p145
      %p147 = scmp.ne.s32.totalorder %s138, %s139
      %p148 = scmp.eq.s32.totalorder %s39, 0
      %p149 = por %p147, %p148
      %p150 = scmp.ne.s32.totalorder %s138, %s139
      %p151 = scmp.eq.s32.totalorder %s40, 1
      %p152 = por %p150, %p151
      %p154 = scmp.ne.s32.totalorder %s139, %s153
      %p155 = scmp.eq.s32.totalorder %s40, 0
      %p156 = por %p154, %p155
      %s158 = sadd.s32 %s157, 1
      %p161 = scmp.eq.s32.totalorder %s34, 1
      %p162 = scmp.ne.s32.totalorder %s157, %s159
      %p163 = scmp.eq.s32.totalorder %s34, 0
      %p164 = por %p162, %p163
      %p165 = scmp.ne.s32.totalorder %s157, %s159
      %p166 = scmp.eq.s32.totalorder %s39, 1
      %p167 = por %p165, %p166
      %p168 = scmp.ne.s32.totalorder %s159, %s160
      %p169 = scmp.eq.s32.totalorder %s39, 0
      %p170 = por %p168, %p169
      %p171 = scmp.ne.s32.totalorder %s159, %s160
      %p172 = scmp.eq.s32.totalorder %s40, 1
      %p173 = por %p171, %p172
      %p175 = scmp.ne.s32.totalorder %s160, %s174
      %p176 = scmp.eq.s32.totalorder %s40, 0
      %p177 = por %p175, %p176
      %s179 = sadd.s32 %s178, 1
      %p182 = scmp.eq.s32.totalorder %s34, 1
      %p183 = scmp.ne.s32.totalorder %s178, %s180
      %p184 = scmp.eq.s32.totalorder %s34, 0
      %p185 = por %p183, %p184
      %p186 = scmp.ne.s32.totalorder %s178, %s180
      %p187 = scmp.eq.s32.totalorder %s39, 1
      %p188 = por %p186, %p187
      %p189 = scmp.ne.s32.totalorder %s180, %s181
      %p190 = scmp.eq.s32.totalorder %s39, 0
      %p191 = por %p189, %p190
      %p192 = scmp.ne.s32.totalorder %s180, %s181
      %p193 = scmp.eq.s32.totalorder %s40, 1
      %p194 = por %p192, %p193
      %p196 = scmp.ne.s32.totalorder %s181, %s195
      %p197 = scmp.eq.s32.totalorder %s40, 0
      %p198 = por %p196, %p197
      %s200 = sadd.s32 %s199, 1
      %p203 = scmp.eq.s32.totalorder %s34, 1
      %p204 = scmp.ne.s32.totalorder %s199, %s201
      %p205 = scmp.eq.s32.totalorder %s34, 0
      %p206 = por %p204, %p205
      %p207 = scmp.ne.s32.totalorder %s199, %s201
      %p208 = scmp.eq.s32.totalorder %s39, 1
      %p209 = por %p207, %p208
      %p210 = scmp.ne.s32.totalorder %s201, %s202
      %p211 = scmp.eq.s32.totalorder %s39, 0
      %p212 = por %p210, %p211
      %p213 = scmp.ne.s32.totalorder %s201, %s202
      %p214 = scmp.eq.s32.totalorder %s40, 1
      %p215 = por %p213, %p214
      %p217 = scmp.ne.s32.totalorder %s202, %s216
      %p218 = scmp.eq.s32.totalorder %s40, 0
      %p219 = por %p217, %p218
      %s221 = sadd.s32 %s220, 1
      %p224 = scmp.eq.s32.totalorder %s34, 1
      %p225 = scmp.ne.s32.totalorder %s220, %s222
      %p226 = scmp.eq.s32.totalorder %s34, 0
      %p227 = por %p225, %p226
      %p228 = scmp.ne.s32.totalorder %s220, %s222
      %p229 = scmp.eq.s32.totalorder %s39, 1
      %p230 = por %p228, %p229
      %p231 = scmp.ne.s32.totalorder %s222, %s223
      %p232 = scmp.eq.s32.totalorder %s39, 0
      %p233 = por %p231, %p232
      %p234 = scmp.ne.s32.totalorder %s222, %s223
      %p235 = scmp.eq.s32.totalorder %s40, 1
      %p236 = por %p234, %p235
      %p238 = scmp.ne.s32.totalorder %s223, %s237
      %p239 = scmp.eq.s32.totalorder %s40, 0
      %p240 = por %p238, %p239
      %s242 = sadd.s32 %s241, 1
      %p245 = scmp.eq.s32.totalorder %s34, 1
      %p246 = scmp.ne.s32.totalorder %s241, %s243
      %p247 = scmp.eq.s32.totalorder %s34, 0
      %p248 = por %p246, %p247
      %p249 = scmp.ne.s32.totalorder %s241, %s243
      %p250 = scmp.eq.s32.totalorder %s39, 1
      %p251 = por %p249, %p250
      %p252 = scmp.ne.s32.totalorder %s243, %s244
      %p253 = scmp.eq.s32.totalorder %s39, 0
      %p254 = por %p252, %p253
      %p255 = scmp.ne.s32.totalorder %s243, %s244
      %p256 = scmp.eq.s32.totalorder %s40, 1
      %p257 = por %p255, %p256
      %p259 = scmp.ne.s32.totalorder %s244, %s258
      %p260 = scmp.eq.s32.totalorder %s40, 0
      %p261 = por %p259, %p260
      %s263 = sadd.s32 %s262, 1
      %p266 = scmp.eq.s32.totalorder %s34, 1
      %p267 = scmp.ne.s32.totalorder %s262, %s264
      %p268 = scmp.eq.s32.totalorder %s34, 0
      %p269 = por %p267, %p268
      %p270 = scmp.ne.s32.totalorder %s262, %s264
      %p271 = scmp.eq.s32.totalorder %s39, 1
      %p272 = por %p270, %p271
      %p273 = scmp.ne.s32.totalorder %s264, %s265
      %p274 = scmp.eq.s32.totalorder %s39, 0
      %p275 = por %p273, %p274
      %p276 = scmp.ne.s32.totalorder %s264, %s265
      %p277 = scmp.eq.s32.totalorder %s40, 1
      %p278 = por %p276, %p277
      %p280 = scmp.ne.s32.totalorder %s265, %s279
      %p281 = scmp.eq.s32.totalorder %s40, 0
      %p282 = por %p280, %p281
      %s284 = sadd.s32 %s283, 1
      %p287 = scmp.eq.s32.totalorder %s34, 1
      %p288 = scmp.ne.s32.totalorder %s283, %s285
      %p289 = scmp.eq.s32.totalorder %s34, 0
      %p290 = por %p288, %p289
      %p291 = scmp.ne.s32.totalorder %s283, %s285
      %p292 = scmp.eq.s32.totalorder %s39, 1
      %p293 = por %p291, %p292
      %p294 = scmp.ne.s32.totalorder %s285, %s286
      %p295 = scmp.eq.s32.totalorder %s39, 0
      %p296 = por %p294, %p295
      %p297 = scmp.ne.s32.totalorder %s285, %s286
      %p298 = scmp.eq.s32.totalorder %s40, 1
      %p299 = por %p297, %p298
      %p301 = scmp.ne.s32.totalorder %s286, %s300
      %p302 = scmp.eq.s32.totalorder %s40, 0
      %p303 = por %p301, %p302
      %s305 = sadd.s32 %s304, 1
      %p308 = scmp.eq.s32.totalorder %s34, 1
      %p309 = scmp.ne.s32.totalorder %s304, %s306
      %p310 = scmp.eq.s32.totalorder %s34, 0
      %p311 = por %p309, %p310
      %p312 = scmp.ne.s32.totalorder %s304, %s306
      %p313 = scmp.eq.s32.totalorder %s39, 1
      %p314 = por %p312, %p313
      %p315 = scmp.ne.s32.totalorder %s306, %s307
      %p316 = scmp.eq.s32.totalorder %s39, 0
      %p317 = por %p315, %p316
      %p318 = scmp.ne.s32.totalorder %s306, %s307
      %p319 = scmp.eq.s32.totalorder %s40, 1
      %p320 = por %p318, %p319
      %p322 = scmp.ne.s32.totalorder %s307, %s321
      %p323 = scmp.eq.s32.totalorder %s40, 0
      %p324 = por %p322, %p323
      %s326 = sadd.s32 %s325, 1
      %p329 = scmp.eq.s32.totalorder %s34, 1
      %p330 = scmp.ne.s32.totalorder %s325, %s327
      %p331 = scmp.eq.s32.totalorder %s34, 0
      %p332 = por %p330, %p331
      %p333 = scmp.ne.s32.totalorder %s325, %s327
      %p334 = scmp.eq.s32.totalorder %s39, 1
      %p335 = por %p333, %p334
      %p336 = scmp.ne.s32.totalorder %s327, %s328
      %p337 = scmp.eq.s32.totalorder %s39, 0
      %p338 = por %p336, %p337
      %p339 = scmp.ne.s32.totalorder %s327, %s328
      %p340 = scmp.eq.s32.totalorder %s40, 1
      %p341 = por %p339, %p340
      %p343 = scmp.ne.s32.totalorder %s328, %s342
      %p344 = scmp.eq.s32.totalorder %s40, 0
      %p345 = por %p343, %p344
      %s347 = sadd.s32 %s346, 1
      %p350 = scmp.eq.s32.totalorder %s34, 1
      %p351 = scmp.ne.s32.totalorder %s346, %s348
      %p352 = scmp.eq.s32.totalorder %s34, 0
      %p353 = por %p351, %p352
      %p354 = scmp.ne.s32.totalorder %s346, %s348
      %p355 = scmp.eq.s32.totalorder %s39, 1
      %p356 = por %p354, %p355
      %p357 = scmp.ne.s32.totalorder %s348, %s349
      %p358 = scmp.eq.s32.totalorder %s39, 0
      %p359 = por %p357, %p358
      %p360 = scmp.ne.s32.totalorder %s348, %s349
      %p361 = scmp.eq.s32.totalorder %s40, 1
      %p362 = por %p360, %p361
      %p364 = scmp.ne.s32.totalorder %s349, %s363
      %p365 = scmp.eq.s32.totalorder %s40, 0
      %p366 = por %p364, %p365
      %s368 = sadd.s32 %s367, 1
      %p371 = scmp.eq.s32.totalorder %s34, 1
      %p372 = scmp.ne.s32.totalorder %s367, %s369
      %p373 = scmp.eq.s32.totalorder %s34, 0
      %p374 = por %p372, %p373
      %p375 = scmp.ne.s32.totalorder %s367, %s369
      %p376 = scmp.eq.s32.totalorder %s39, 1
      %p377 = por %p375, %p376
      %p378 = scmp.ne.s32.totalorder %s369, %s370
      %p379 = scmp.eq.s32.totalorder %s39, 0
      %p380 = por %p378, %p379
      %p381 = scmp.ne.s32.totalorder %s369, %s370
      %p382 = scmp.eq.s32.totalorder %s40, 1
      %p383 = por %p381, %p382
      %p385 = scmp.ne.s32.totalorder %s370, %s384
      %p386 = scmp.eq.s32.totalorder %s40, 0
      %p387 = por %p385, %p386
      %s389 = sadd.s32 %s388, 1
      %p392 = scmp.eq.s32.totalorder %s34, 1
      %p393 = scmp.ne.s32.totalorder %s388, %s390
      %p394 = scmp.eq.s32.totalorder %s34, 0
      %p395 = por %p393, %p394
      %p396 = scmp.ne.s32.totalorder %s388, %s390
      %p397 = scmp.eq.s32.totalorder %s39, 1
      %p398 = por %p396, %p397
      %p399 = scmp.ne.s32.totalorder %s390, %s391
      %p400 = scmp.eq.s32.totalorder %s39, 0
      %p401 = por %p399, %p400
      %p402 = scmp.ne.s32.totalorder %s390, %s391
      %p403 = scmp.eq.s32.totalorder %s40, 1
      %p404 = por %p402, %p403
      %p406 = scmp.ne.s32.totalorder %s391, %s405
      %p407 = scmp.eq.s32.totalorder %s40, 0
      %p408 = por %p406, %p407
      %s410 = sadd.s32 %s409, 1
      %p413 = scmp.eq.s32.totalorder %s34, 1
      %p414 = scmp.ne.s32.totalorder %s409, %s411
      %p415 = scmp.eq.s32.totalorder %s34, 0
      %p416 = por %p414, %p415
      %p417 = scmp.ne.s32.totalorder %s409, %s411
      %p418 = scmp.eq.s32.totalorder %s39, 1
      %p419 = por %p417, %p418
      %p420 = scmp.ne.s32.totalorder %s411, %s412
      %p421 = scmp.eq.s32.totalorder %s39, 0
      %p422 = por %p420, %p421
      %p423 = scmp.ne.s32.totalorder %s411, %s412
      %p424 = scmp.eq.s32.totalorder %s40, 1
      %p425 = por %p423, %p424
      %p427 = scmp.ne.s32.totalorder %s412, %s426
      %p428 = scmp.eq.s32.totalorder %s40, 0
      %p429 = por %p427, %p428
      %s431 = sadd.s32 %s430, 1
      %p434 = scmp.eq.s32.totalorder %s34, 1
      %p435 = scmp.ne.s32.totalorder %s430, %s432
      %p436 = scmp.eq.s32.totalorder %s34, 0
      %p437 = por %p435, %p436
      %p438 = scmp.ne.s32.totalorder %s430, %s432
      %p439 = scmp.eq.s32.totalorder %s39, 1
      %p440 = por %p438, %p439
      %p441 = scmp.ne.s32.totalorder %s432, %s433
      %p442 = scmp.eq.s32.totalorder %s39, 0
      %p443 = por %p441, %p442
      %p444 = scmp.ne.s32.totalorder %s432, %s433
      %p445 = scmp.eq.s32.totalorder %s40, 1
      %p446 = por %p444, %p445
      %p448 = scmp.ne.s32.totalorder %s433, %s447
      %p449 = scmp.eq.s32.totalorder %s40, 0
      %p450 = por %p448, %p449
      %s452 = sadd.s32 %s451, 1
      %p455 = scmp.eq.s32.totalorder %s34, 1
      %p456 = scmp.ne.s32.totalorder %s451, %s453
      %p457 = scmp.eq.s32.totalorder %s34, 0
      %p458 = por %p456, %p457
      %p459 = scmp.ne.s32.totalorder %s451, %s453
      %p460 = scmp.eq.s32.totalorder %s39, 1
      %p461 = por %p459, %p460
      %p462 = scmp.ne.s32.totalorder %s453, %s454
      %p463 = scmp.eq.s32.totalorder %s39, 0
      %p464 = por %p462, %p463
      %p465 = scmp.ne.s32.totalorder %s453, %s454
      %p466 = scmp.eq.s32.totalorder %s40, 1
      %p467 = por %p465, %p466
      %p469 = scmp.ne.s32.totalorder %s454, %s468
      %p470 = scmp.eq.s32.totalorder %s40, 0
      %p471 = por %p469, %p470
      %s472 = ssub.s32 %s34, %s41
      %p473 = scmp.eq.s32.totalorder %s472, 0
      %s475 = sadd.s32 %s474, 1
      %s476 = scalar_select %p473, %s474, %s475
      %p479 = pneg %p473
      %p480 = scmp.eq.s32.totalorder %s34, 1
      %p481 = por %p479, %p480
      %p482 = scmp.ne.s32.totalorder %s474, %s477
      %p483 = scmp.eq.s32.totalorder %s34, 0
      %p484 = por %p482, %p483
      %p485 = scmp.ne.s32.totalorder %s474, %s477
      %p486 = scmp.eq.s32.totalorder %s39, 1
      %p487 = por %p485, %p486
      %p488 = scmp.ne.s32.totalorder %s477, %s478
      %p489 = scmp.eq.s32.totalorder %s39, 0
      %p490 = por %p488, %p489
      %p491 = scmp.ne.s32.totalorder %s477, %s478
      %p492 = scmp.eq.s32.totalorder %s40, 1
      %p493 = por %p491, %p492
      %p495 = scmp.ne.s32.totalorder %s478, %s494
      %p496 = scmp.eq.s32.totalorder %s40, 0
      %p497 = por %p495, %p496
      %s498 = ssub.s32 %s34, %s41
      %p499 = scmp.eq.s32.totalorder %s498, 0
      %s501 = sadd.s32 %s500, 1
      %s502 = scalar_select %p499, %s500, %s501
      %p505 = pneg %p499
      %p506 = scmp.eq.s32.totalorder %s34, 1
      %p507 = por %p505, %p506
      %p508 = scmp.ne.s32.totalorder %s500, %s503
      %p509 = scmp.eq.s32.totalorder %s34, 0
      %p510 = por %p508, %p509
      %p511 = scmp.ne.s32.totalorder %s500, %s503
      %p512 = scmp.eq.s32.totalorder %s39, 1
      %p513 = por %p511, %p512
      %p514 = scmp.ne.s32.totalorder %s503, %s504
      %p515 = scmp.eq.s32.totalorder %s39, 0
      %p516 = por %p514, %p515
      %p517 = scmp.ne.s32.totalorder %s503, %s504
      %p518 = scmp.eq.s32.totalorder %s40, 1
      %p519 = por %p517, %p518
      %p521 = scmp.ne.s32.totalorder %s504, %s520
      %p522 = scmp.eq.s32.totalorder %s40, 0
      %p523 = por %p521, %p522
      %s524 = ssub.s32 %s34, %s41
      %p525 = scmp.eq.s32.totalorder %s524, 0
      %s527 = sadd.s32 %s526, 1
      %s528 = scalar_select %p525, %s526, %s527
      %p531 = pneg %p525
      %p532 = scmp.eq.s32.totalorder %s34, 1
      %p533 = por %p531, %p532
      %p534 = scmp.ne.s32.totalorder %s526, %s529
      %p535 = scmp.eq.s32.totalorder %s34, 0
      %p536 = por %p534, %p535
      %p537 = scmp.ne.s32.totalorder %s526, %s529
      %p538 = scmp.eq.s32.totalorder %s39, 1
      %p539 = por %p537, %p538
      %p540 = scmp.ne.s32.totalorder %s529, %s530
      %p541 = scmp.eq.s32.totalorder %s39, 0
      %p542 = por %p540, %p541
      %p543 = scmp.ne.s32.totalorder %s529, %s530
      %p544 = scmp.eq.s32.totalorder %s40, 1
      %p545 = por %p543, %p544
      %p547 = scmp.ne.s32.totalorder %s530, %s546
      %p548 = scmp.eq.s32.totalorder %s40, 0
      %p549 = por %p547, %p548
      %p550 = scmp.le.s32.totalorder 1, %s34
      %p551 = scmp.lt.s32.totalorder %s34, 3
      %p552 = pnand %p550, %p551
      %p553 = pneg %p552
      // Predicated region
      $region9: #{vde_forward.1} parent=5 // pred_check
        _
      $region10: #{vde_forward.1} parent=5 // pred_check_branch
        %555 = sbr.rel (%p552) target = $region12
      $region11: #{vde_forward.1} parent=5 // pred_region
        %s556 = ssub.s32 %s34, 1
        // Predicated region
        $region13: #{vde_forward.1} parent=11 // pred_check
          %p557 = pneg %p107
        $region14: #{vde_forward.1} parent=11 // pred_check_branch
          %559 = sbr.rel (%p557) target = $region16
        $region15: #{vde_forward.1} parent=11 // pred_region
          _
        $region16: #{vde_forward.1} parent=11 // pred_fallthru
          _
        // Predicated region
        $region17: #{vde_forward.1} parent=11 // pred_check
          %p560 = pneg %p128
        $region18: #{vde_forward.1} parent=11 // pred_check_branch
          %562 = sbr.rel (%p560) target = $region20
        $region19: #{vde_forward.1} parent=11 // pred_region
          _
        $region20: #{vde_forward.1} parent=11 // pred_fallthru
          _
        // Predicated region
        $region21: #{vde_forward.1} parent=11 // pred_check
          %p563 = pneg %p149
        $region22: #{vde_forward.1} parent=11 // pred_check_branch
          %565 = sbr.rel (%p563) target = $region24
        $region23: #{vde_forward.1} parent=11 // pred_region
          %s567 = ssub.s32 1024, 1024
          %568 = vsyncadd [#allocation3], %s567
          %s569 = sshll.u32 [#allocation2], 4
          %s570 = int_to_ptr.vmem [resolvable:$true] %s569
          %575 = dma.hbm_to_vmem [thread:$0]  %s4, 1024, %s570, [#allocation3], 64, 64, 4
        $region24: #{vde_forward.1} parent=11 // pred_fallthru
          _
        // Predicated region
        $region25: #{vde_forward.1} parent=11 // pred_check
          %p576 = pneg %p170
        $region26: #{vde_forward.1} parent=11 // pred_check_branch
          %578 = sbr.rel (%p576) target = $region28
        $region27: #{vde_forward.1} parent=11 // pred_region
          _
        $region28: #{vde_forward.1} parent=11 // pred_fallthru
          _
        // Predicated region
        $region29: #{vde_forward.1} parent=11 // pred_check
          %p579 = pneg %p191
        $region30: #{vde_forward.1} parent=11 // pred_check_branch
          %581 = sbr.rel (%p579) target = $region32
        $region31: #{vde_forward.1} parent=11 // pred_region
          %s583 = ssub.s32 1024, 1024
          %584 = vsyncadd [#allocation5], %s583
          %s585 = sshll.u32 [#allocation4], 4
          %s586 = int_to_ptr.vmem [resolvable:$true] %s585
          %591 = dma.hbm_to_vmem [thread:$0]  %s6, 1024, %s586, [#allocation5], 64, 64, 4
        $region32: #{vde_forward.1} parent=11 // pred_fallthru
          _
        // Predicated region
        $region33: #{vde_forward.1} parent=11 // pred_check
          %p592 = pneg %p212
        $region34: #{vde_forward.1} parent=11 // pred_check_branch
          %594 = sbr.rel (%p592) target = $region36
        $region35: #{vde_forward.1} parent=11 // pred_region
          _
        $region36: #{vde_forward.1} parent=11 // pred_fallthru
          _
        // Predicated region
        $region37: #{vde_forward.1} parent=11 // pred_check
          %p595 = pneg %p233
        $region38: #{vde_forward.1} parent=11 // pred_check_branch
          %597 = sbr.rel (%p595) target = $region40
        $region39: #{vde_forward.1} parent=11 // pred_region
          %s599 = ssub.s32 2048, 2048
          %600 = vsyncadd [#allocation5], %s599
          %s601 = sshll.u32 [#allocation6], 4
          %s602 = int_to_ptr.vmem [resolvable:$true] %s601
          %607 = dma.hbm_to_vmem [thread:$0]  %s8, 2048, %s602, [#allocation5], 128, 128, 8
        $region40: #{vde_forward.1} parent=11 // pred_fallthru
          _
        // Predicated region
        $region41: #{vde_forward.1} parent=11 // pred_check
          %p608 = pneg %p254
        $region42: #{vde_forward.1} parent=11 // pred_check_branch
          %610 = sbr.rel (%p608) target = $region44
        $region43: #{vde_forward.1} parent=11 // pred_region
          _
        $region44: #{vde_forward.1} parent=11 // pred_fallthru
          _
        // Predicated region
        $region45: #{vde_forward.1} parent=11 // pred_check
          %p611 = pneg %p275
        $region46: #{vde_forward.1} parent=11 // pred_check_branch
          %613 = sbr.rel (%p611) target = $region48
        $region47: #{vde_forward.1} parent=11 // pred_region
          %s615 = ssub.s32 1024, 1024
          %616 = vsyncadd [#allocation8], %s615
          %s617 = sshll.u32 [#allocation7], 4
          %s618 = int_to_ptr.vmem [resolvable:$true] %s617
          %623 = dma.hbm_to_vmem [thread:$0]  %s10, 1024, %s618, [#allocation8], 64, 64, 4
        $region48: #{vde_forward.1} parent=11 // pred_fallthru
          _
        // Predicated region
        $region49: #{vde_forward.1} parent=11 // pred_check
          %p624 = pneg %p296
        $region50: #{vde_forward.1} parent=11 // pred_check_branch
          %626 = sbr.rel (%p624) target = $region52
        $region51: #{vde_forward.1} parent=11 // pred_region
          _
        $region52: #{vde_forward.1} parent=11 // pred_fallthru
          _
        // Predicated region
        $region53: #{vde_forward.1} parent=11 // pred_check
          %p627 = pneg %p317
        $region54: #{vde_forward.1} parent=11 // pred_check_branch
          %629 = sbr.rel (%p627) target = $region56
        $region55: #{vde_forward.1} parent=11 // pred_region
          %s631 = ssub.s32 1024, 1024
          %632 = vsyncadd [#allocation8], %s631
          %s633 = sshll.u32 [#allocation9], 4
          %s634 = int_to_ptr.vmem [resolvable:$true] %s633
          %639 = dma.hbm_to_vmem [thread:$0]  %s12, 1024, %s634, [#allocation8], 64, 64, 4
        $region56: #{vde_forward.1} parent=11 // pred_fallthru
          _
        // Predicated region
        $region57: #{vde_forward.1} parent=11 // pred_check
          %p640 = pneg %p338
        $region58: #{vde_forward.1} parent=11 // pred_check_branch
          %642 = sbr.rel (%p640) target = $region60
        $region59: #{vde_forward.1} parent=11 // pred_region
          _
        $region60: #{vde_forward.1} parent=11 // pred_fallthru
          _
        // Predicated region
        $region61: #{vde_forward.1} parent=11 // pred_check
          %p643 = pneg %p359
        $region62: #{vde_forward.1} parent=11 // pred_check_branch
          %645 = sbr.rel (%p643) target = $region64
        $region63: #{vde_forward.1} parent=11 // pred_region
          %s647 = ssub.s32 1024, 1024
          %648 = vsyncadd [#allocation11], %s647
          %s649 = sshll.u32 [#allocation10], 4
          %s650 = int_to_ptr.vmem [resolvable:$true] %s649
          %655 = dma.hbm_to_vmem [thread:$0]  %s14, 1024, %s650, [#allocation11], 64, 64, 4
        $region64: #{vde_forward.1} parent=11 // pred_fallthru
          _
        // Predicated region
        $region65: #{vde_forward.1} parent=11 // pred_check
          %p656 = pneg %p380
        $region66: #{vde_forward.1} parent=11 // pred_check_branch
          %658 = sbr.rel (%p656) target = $region68
        $region67: #{vde_forward.1} parent=11 // pred_region
          _
        $region68: #{vde_forward.1} parent=11 // pred_fallthru
          _
        // Predicated region
        $region69: #{vde_forward.1} parent=11 // pred_check
          %p659 = pneg %p401
        $region70: #{vde_forward.1} parent=11 // pred_check_branch
          %661 = sbr.rel (%p659) target = $region72
        $region71: #{vde_forward.1} parent=11 // pred_region
          %s663 = ssub.s32 1024, 1024
          %664 = vsyncadd [#allocation11], %s663
          %s665 = sshll.u32 [#allocation12], 4
          %s666 = int_to_ptr.vmem [resolvable:$true] %s665
          %671 = dma.hbm_to_vmem [thread:$0]  %s16, 1024, %s666, [#allocation11], 64, 64, 4
        $region72: #{vde_forward.1} parent=11 // pred_fallthru
          _
        // Predicated region
        $region73: #{vde_forward.1} parent=11 // pred_check
          %p672 = pneg %p422
        $region74: #{vde_forward.1} parent=11 // pred_check_branch
          %674 = sbr.rel (%p672) target = $region76
        $region75: #{vde_forward.1} parent=11 // pred_region
          _
        $region76: #{vde_forward.1} parent=11 // pred_fallthru
          _
        // Predicated region
        $region77: #{vde_forward.1} parent=11 // pred_check
          %p675 = pneg %p443
        $region78: #{vde_forward.1} parent=11 // pred_check_branch
          %677 = sbr.rel (%p675) target = $region80
        $region79: #{vde_forward.1} parent=11 // pred_region
          %s679 = ssub.s32 1024, 1024
          %680 = vsyncadd [#allocation14], %s679
          %s681 = sshll.u32 [#allocation13], 4
          %s682 = int_to_ptr.vmem [resolvable:$true] %s681
          %687 = dma.hbm_to_vmem [thread:$0]  %s18, 1024, %s682, [#allocation14], 64, 64, 4
        $region80: #{vde_forward.1} parent=11 // pred_fallthru
          _
        // Predicated region
        $region81: #{vde_forward.1} parent=11 // pred_check
          %p688 = pneg %p464
        $region82: #{vde_forward.1} parent=11 // pred_check_branch
          %690 = sbr.rel (%p688) target = $region84
        $region83: #{vde_forward.1} parent=11 // pred_region
          _
        $region84: #{vde_forward.1} parent=11 // pred_fallthru
          _
      $region12: #{vde_forward.1} parent=5 // pred_fallthru
        _
      %p691 = scmp.lt.s32.totalorder %s34, 2
      // Predicated region
      $region85: #{vde_forward.1} parent=5 // pred_check
        %p692 = pneg %p691
      $region86: #{vde_forward.1} parent=5 // pred_check_branch
        %694 = sbr.rel (%p692) target = $region88
      $region87: #{vde_forward.1} parent=5 // pred_region
        // Predicated region
        $region89: #{vde_forward.1} parent=87 // pred_check
          %p695 = pneg %p54
        $region90: #{vde_forward.1} parent=87 // pred_check_branch
          %697 = sbr.rel (%p695) target = $region92
        $region91: #{vde_forward.1} parent=87 // pred_region
          %p698 = scmp.lt.s32.totalorder %s34, 1
          %s699 = scalar_select %p698, %s34, 1
          %s700 = smul.addr %s699, 4
          %s701 = scalar_lea.vmem %s0, %s700
        $region92: #{vde_forward.1} parent=87 // pred_fallthru
          _
        // Predicated region
        $region93: #{vde_forward.1} parent=87 // pred_check
          %p702 = pneg %p80
        $region94: #{vde_forward.1} parent=87 // pred_check_branch
          %704 = sbr.rel (%p702) target = $region96
        $region95: #{vde_forward.1} parent=87 // pred_region
          %p705 = scmp.lt.s32.totalorder %s34, 1
          %s706 = scalar_select %p705, %s34, 1
          %s707 = smul.addr %s706, 8
          %s708 = scalar_lea.vmem %s1, %s707
        $region96: #{vde_forward.1} parent=87 // pred_fallthru
          _
      $region88: #{vde_forward.1} parent=5 // pred_fallthru
        _
      %p709 = scmp.le.s32.totalorder 1, %s34
      %p710 = scmp.lt.s32.totalorder %s34, 3
      %p711 = pnand %p709, %p710
      %p712 = pneg %p711
      // Predicated region
      $region97: #{vde_forward.1} parent=5 // pred_check
        _
      $region98: #{vde_forward.1} parent=5 // pred_check_branch
        %714 = sbr.rel (%p711) target = $region100
      $region99: #{vde_forward.1} parent=5 // pred_region
        %s715 = ssub.s32 %s34, 1
        // Predicated region
        $region101: #{vde_forward.1} parent=99 // pred_check
          %p716 = pneg %p149
        $region102: #{vde_forward.1} parent=99 // pred_check_branch
          %718 = sbr.rel (%p716) target = $region104
        $region103: #{vde_forward.1} parent=99 // pred_region
          %719 = dma.done [#allocation3], 1024
        $region104: #{vde_forward.1} parent=99 // pred_fallthru
          _
        // Predicated region
        $region105: #{vde_forward.1} parent=99 // pred_check
          %p720 = pneg %p191
        $region106: #{vde_forward.1} parent=99 // pred_check_branch
          %722 = sbr.rel (%p720) target = $region108
        $region107: #{vde_forward.1} parent=99 // pred_region
          %723 = dma.done [#allocation5], 1024
        $region108: #{vde_forward.1} parent=99 // pred_fallthru
          _
        // Predicated region
        $region109: #{vde_forward.1} parent=99 // pred_check
          %p724 = pneg %p233
        $region110: #{vde_forward.1} parent=99 // pred_check_branch
          %726 = sbr.rel (%p724) target = $region112
        $region111: #{vde_forward.1} parent=99 // pred_region
          %727 = dma.done [#allocation5], 2048
        $region112: #{vde_forward.1} parent=99 // pred_fallthru
          _
        // Predicated region
        $region113: #{vde_forward.1} parent=99 // pred_check
          %p728 = pneg %p275
        $region114: #{vde_forward.1} parent=99 // pred_check_branch
          %730 = sbr.rel (%p728) target = $region116
        $region115: #{vde_forward.1} parent=99 // pred_region
          %731 = dma.done [#allocation8], 1024
        $region116: #{vde_forward.1} parent=99 // pred_fallthru
          _
        // Predicated region
        $region117: #{vde_forward.1} parent=99 // pred_check
          %p732 = pneg %p317
        $region118: #{vde_forward.1} parent=99 // pred_check_branch
          %734 = sbr.rel (%p732) target = $region120
        $region119: #{vde_forward.1} parent=99 // pred_region
          %735 = dma.done [#allocation8], 1024
        $region120: #{vde_forward.1} parent=99 // pred_fallthru
          _
        // Predicated region
        $region121: #{vde_forward.1} parent=99 // pred_check
          %p736 = pneg %p359
        $region122: #{vde_forward.1} parent=99 // pred_check_branch
          %738 = sbr.rel (%p736) target = $region124
        $region123: #{vde_forward.1} parent=99 // pred_region
          %739 = dma.done [#allocation11], 1024
        $region124: #{vde_forward.1} parent=99 // pred_fallthru
          _
        // Predicated region
        $region125: #{vde_forward.1} parent=99 // pred_check
          %p740 = pneg %p401
        $region126: #{vde_forward.1} parent=99 // pred_check_branch
          %742 = sbr.rel (%p740) target = $region128
        $region127: #{vde_forward.1} parent=99 // pred_region
          %743 = dma.done [#allocation11], 1024
        $region128: #{vde_forward.1} parent=99 // pred_fallthru
          _
        // Predicated region
        $region129: #{vde_forward.1} parent=99 // pred_check
          %p744 = pneg %p443
        $region130: #{vde_forward.1} parent=99 // pred_check_branch
          %746 = sbr.rel (%p744) target = $region132
        $region131: #{vde_forward.1} parent=99 // pred_region
          %747 = dma.done [#allocation14], 1024
        $region132: #{vde_forward.1} parent=99 // pred_fallthru
          _
        %p748 = scmp.lt.s32.totalorder %s39, 1
        %s749 = scalar_select %p748, %s39, 1
        %s750 = smul.addr %s749, 4
        %s751 = scalar_lea.vmem %s0, %s750
        %p752 = pneg %p60
        %p753 = pneg %p57
        %p754 = scmp.lt.s32.totalorder %s39, 1
        %s755 = scalar_select %p754, %s39, 1
        %s756 = smul.addr %s755, 8
        %s757 = scalar_lea.vmem %s1, %s756
        %p758 = pneg %p86
        %p759 = pneg %p83
        %p760 = pneg %p107
        %p761 = pneg %p104
        %p762 = pneg %p128
        %p763 = pneg %p125
        %p764 = pneg %p149
        %p765 = pneg %p146
        %p766 = pneg %p170
        %p767 = pneg %p167
        %p768 = pneg %p191
        %p769 = pneg %p188
        %p770 = pneg %p212
        %p771 = pneg %p209
        %p772 = pneg %p233
        %p773 = pneg %p230
        %p774 = pneg %p254
        %p775 = pneg %p251
        %p776 = pneg %p275
        %p777 = pneg %p272
        %p778 = pneg %p296
        %p779 = pneg %p293
        %p780 = pneg %p317
        %p781 = pneg %p314
        %p782 = pneg %p338
        %p783 = pneg %p335
        %p784 = pneg %p359
        %p785 = pneg %p356
        %p786 = pneg %p380
        %p787 = pneg %p377
        %p788 = pneg %p401
        %p789 = pneg %p398
        %p790 = pneg %p422
        %p791 = pneg %p419
        %p792 = pneg %p443
        %p793 = pneg %p440
        %p794 = pneg %p464
        %p795 = pneg %p461
        %p796 = pneg %p490
        %p797 = pneg %p487
        %p798 = scmp.lt.s32.totalorder %s39, 1
        %s799 = scalar_select %p798, %s39, 1
        %s800 = smul.addr %s799, 8
        %s801 = scalar_lea.vmem %s20, %s800
        %p802 = pneg %p516
        %p803 = pneg %p513
        %p804 = scmp.lt.s32.totalorder %s39, 1
        %s805 = scalar_select %p804, %s39, 1
        %s806 = smul.addr %s805, 8
        %s807 = scalar_lea.vmem %s21, %s806
        %p808 = pneg %p542
        %p809 = pneg %p539
        %p810 = scmp.lt.s32.totalorder %s39, 1
        %s811 = scalar_select %p810, %s39, 1
        %s812 = smul.addr %s811, 8
        %s813 = scalar_lea.vmem %s22, %s812
        %p814 = scmp.lt.s32.totalorder %s39, 1
        %s815 = scalar_select %p814, %s39, 1
        %s816 = smul.addr %s815, 4
        %s817 = scalar_lea.vmem %s0, %s816
        %p818 = scmp.lt.s32.totalorder %s39, 1
        %s819 = scalar_select %p818, %s39, 1
        %s820 = smul.addr %s819, 8
        %s821 = scalar_lea.vmem %s1, %s820
        %p822 = scmp.lt.s32.totalorder %s39, 1
        %s823 = scalar_select %p822, %s39, 1
        %s824 = smul.addr %s823, 8
        %s825 = scalar_lea.vmem %s20, %s824
        %p826 = scmp.lt.s32.totalorder %s39, 1
        %s827 = scalar_select %p826, %s39, 1
        %s828 = smul.addr %s827, 8
        %s829 = scalar_lea.vmem %s21, %s828
        %p830 = scmp.lt.s32.totalorder %s39, 1
        %s831 = scalar_select %p830, %s39, 1
        %s832 = smul.addr %s831, 8
        %s833 = scalar_lea.vmem %s22, %s832
        %v835 = vld [vmem:[%s817] sm:$0xf]
        %v836 = vld [vmem:[%s2] sm:$0xf]
        %v837 = vld [vmem:[%s2 + $0x4] sm:$0xf]
        %v838 = vld [vmem:[%s2 + $0x8] sm:$0xf]
        %v839 = vld [vmem:[%s2 + $0xc] sm:$0xf]
        %v840 = vld [vmem:[%s2 + $0x10] sm:$0xf]
        %v841 = vld [vmem:[%s2 + $0x14] sm:$0xf]
        %v842 = vld [vmem:[%s2 + $0x18] sm:$0xf]
        %v843 = vld [vmem:[%s2 + $0x1c] sm:$0xf]
        %v844 = vld [vmem:[%s2 + $0x20] sm:$0xf]
        %v845 = vld [vmem:[%s2 + $0x24] sm:$0xf]
        %v846 = vld [vmem:[%s2 + $0x28] sm:$0xf]
        %v847 = vld [vmem:[%s2 + $0x2c] sm:$0xf]
        %v848 = vld [vmem:[%s2 + $0x30] sm:$0xf]
        %v849 = vld [vmem:[%s2 + $0x34] sm:$0xf]
        %v850 = vld [vmem:[%s2 + $0x38] sm:$0xf]
        %v851 = vld [vmem:[%s2 + $0x3c] sm:$0xf]
        %v852 = vld [vmem:[%s3] sm:$0x1]
        %v854 = vlaneseq
        %v855 = vshrl.u32 %v854, 7
        %v856 = vsub.s32 0, %v855
        %v857 = vrot.slane %v852, %v856
        %v875 = vunpack.c.l.b16 %v836
        %v876 = vunpack.c.l.b16 %v837
        %v877 = vunpack.c.l.b16 %v838
        %v878 = vunpack.c.l.b16 %v839
        %v879 = vunpack.c.l.b16 %v840
        %v880 = vunpack.c.l.b16 %v841
        %v881 = vunpack.c.l.b16 %v842
        %v882 = vunpack.c.l.b16 %v843
        %v883 = vunpack.c.l.b16 %v844
        %v884 = vunpack.c.l.b16 %v845
        %v885 = vunpack.c.l.b16 %v846
        %v886 = vunpack.c.l.b16 %v847
        %v887 = vunpack.c.l.b16 %v848
        %v888 = vunpack.c.l.b16 %v849
        %v889 = vunpack.c.l.b16 %v850
        %v890 = vunpack.c.l.b16 %v851
        %v891 = vpack.c.b16 %v876, %v875
        %v892 = vpack.c.b16 %v878, %v877
        %v893 = vpack.c.b16 %v880, %v879
        %v894 = vpack.c.b16 %v882, %v881
        %v895 = vpack.c.b16 %v884, %v883
        %v896 = vpack.c.b16 %v886, %v885
        %v897 = vpack.c.b16 %v888, %v887
        %v898 = vpack.c.b16 %v890, %v889
        %907 = vmatprep.subr.bf16.mxu0 0
        %908 = vmatpush1.bf16.msra.mxu0 %v891
        %909 = vmatprep.subr.bf16.mxu0 0
        %910 = vmatpush1.bf16.msra.mxu0 %v892
        %911 = vmatprep.subr.bf16.mxu0 0
        %912 = vmatpush1.bf16.msra.mxu0 %v893
        %913 = vmatprep.subr.bf16.mxu0 0
        %914 = vmatpush1.bf16.msra.mxu0 %v894
        %915 = vmatprep.subr.bf16.mxu0 0
        %916 = vmatpush1.bf16.msra.mxu0 %v895
        %917 = vmatprep.subr.bf16.mxu0 0
        %918 = vmatpush1.bf16.msra.mxu0 %v896
        %919 = vmatprep.subr.bf16.mxu0 0
        %920 = vmatpush1.bf16.msra.mxu0 %v897
        %921 = vmatprep.subr.bf16.mxu0 0
        %922 = vmatpush1.bf16.msra.mxu0 %v898
        %923 = vmatprep.subr.bf16.mxu0 0
        %924 = vmatpush1.bf16.msra.mxu0 0
        %925 = vmatprep.subr.bf16.mxu0 0
        %926 = vmatpush1.bf16.msra.mxu0 0
        %927 = vmatprep.subr.bf16.mxu0 0
        %928 = vmatpush1.bf16.msra.mxu0 0
        %929 = vmatprep.subr.bf16.mxu0 0
        %930 = vmatpush1.bf16.msra.mxu0 0
        %931 = vmatprep.subr.bf16.mxu0 0
        %932 = vmatpush1.bf16.msra.mxu0 0
        %933 = vmatprep.subr.bf16.mxu0 0
        %934 = vmatpush1.bf16.msra.mxu0 0
        %935 = vmatprep.subr.bf16.mxu0 0
        %936 = vmatpush1.bf16.msra.mxu0 0
        %937 = vmatprep.subr.bf16.mxu0 0
        %938 = vmatpush1.bf16.msra.mxu0 0
        %939 = vmatprep.mubr.bf16.mxu0 0
        %940 = vmatmul.mubr.bf16.gmra.mrb[0].mxu0 %v835
        %v941 = vpop.f32.mrb[0].mxu0
        %v942 = vadd.f32 %v857, %v941
        %v943 = vpop.f32.mrb[0].mxu0
        %v944 = vpop.f32.mrb[0].mxu0
        %v945 = vpop.f32.mrb[0].mxu0
        %946 = vdwg.mxu0
        %v947 = vxor.u32 %v942, 2147483648
        %v948 = vmul.f32 %v947, 1.442695
        %v949 = vpow.pop %v948
        %v950 = vadd.f32 %v949, 1.0
        %v951 = vrcp.pop %v950
        %v952 = vmul.f32 1.0, %v951
        %v953 = vmul.f32 %v942, %v952
        %v954 = vpack.c.bf16 %v953, %v953
        %v955 = vld [vmem:[#allocation2] sm:$0xf]
        %v956 = vld [vmem:[#allocation2 + $0x4] sm:$0xf]
        %v957 = vld [vmem:[#allocation2 + $0x8] sm:$0xf]
        %v958 = vld [vmem:[#allocation2 + $0xc] sm:$0xf]
        %v959 = vld [vmem:[#allocation2 + $0x10] sm:$0xf]
        %v960 = vld [vmem:[#allocation2 + $0x14] sm:$0xf]
        %v961 = vld [vmem:[#allocation2 + $0x18] sm:$0xf]
        %v962 = vld [vmem:[#allocation2 + $0x1c] sm:$0xf]
        %v963 = vld [vmem:[#allocation2 + $0x20] sm:$0xf]
        %v964 = vld [vmem:[#allocation2 + $0x24] sm:$0xf]
        %v965 = vld [vmem:[#allocation2 + $0x28] sm:$0xf]
        %v966 = vld [vmem:[#allocation2 + $0x2c] sm:$0xf]
        %v967 = vld [vmem:[#allocation2 + $0x30] sm:$0xf]
        %v968 = vld [vmem:[#allocation2 + $0x34] sm:$0xf]
        %v969 = vld [vmem:[#allocation2 + $0x38] sm:$0xf]
        %v970 = vld [vmem:[#allocation2 + $0x3c] sm:$0xf]
        %v971 = vld [vmem:[%s5] sm:$0x1]
        %v973 = vlaneseq
        %v974 = vshrl.u32 %v973, 7
        %v975 = vsub.s32 0, %v974
        %v976 = vrot.slane %v971, %v975
        %v994 = vunpack.c.l.b16 %v955
        %v995 = vunpack.c.l.b16 %v956
        %v996 = vunpack.c.l.b16 %v957
        %v997 = vunpack.c.l.b16 %v958
        %v998 = vunpack.c.l.b16 %v959
        %v999 = vunpack.c.l.b16 %v960
        %v1000 = vunpack.c.l.b16 %v961
        %v1001 = vunpack.c.l.b16 %v962
        %v1002 = vunpack.c.l.b16 %v963
        %v1003 = vunpack.c.l.b16 %v964
        %v1004 = vunpack.c.l.b16 %v965
        %v1005 = vunpack.c.l.b16 %v966
        %v1006 = vunpack.c.l.b16 %v967
        %v1007 = vunpack.c.l.b16 %v968
        %v1008 = vunpack.c.l.b16 %v969
        %v1009 = vunpack.c.l.b16 %v970
        %v1010 = vpack.c.b16 %v995, %v994
        %v1011 = vpack.c.b16 %v997, %v996
        %v1012 = vpack.c.b16 %v999, %v998
        %v1013 = vpack.c.b16 %v1001, %v1000
        %v1014 = vpack.c.b16 %v1003, %v1002
        %v1015 = vpack.c.b16 %v1005, %v1004
        %v1016 = vpack.c.b16 %v1007, %v1006
        %v1017 = vpack.c.b16 %v1009, %v1008
        %1026 = vmatprep.subr.bf16.mxu0 0
        %1027 = vmatpush1.bf16.msra.mxu0 %v1010
        %1028 = vmatprep.subr.bf16.mxu0 0
        %1029 = vmatpush1.bf16.msra.mxu0 %v1011
        %1030 = vmatprep.subr.bf16.mxu0 0
        %1031 = vmatpush1.bf16.msra.mxu0 %v1012
        %1032 = vmatprep.subr.bf16.mxu0 0
        %1033 = vmatpush1.bf16.msra.mxu0 %v1013
        %1034 = vmatprep.subr.bf16.mxu0 0
        %1035 = vmatpush1.bf16.msra.mxu0 %v1014
        %1036 = vmatprep.subr.bf16.mxu0 0
        %1037 = vmatpush1.bf16.msra.mxu0 %v1015
        %1038 = vmatprep.subr.bf16.mxu0 0
        %1039 = vmatpush1.bf16.msra.mxu0 %v1016
        %1040 = vmatprep.subr.bf16.mxu0 0
        %1041 = vmatpush1.bf16.msra.mxu0 %v1017
        %1042 = vmatprep.subr.bf16.mxu0 0
        %1043 = vmatpush1.bf16.msra.mxu0 0
        %1044 = vmatprep.subr.bf16.mxu0 0
        %1045 = vmatpush1.bf16.msra.mxu0 0
        %1046 = vmatprep.subr.bf16.mxu0 0
        %1047 = vmatpush1.bf16.msra.mxu0 0
        %1048 = vmatprep.subr.bf16.mxu0 0
        %1049 = vmatpush1.bf16.msra.mxu0 0
        %1050 = vmatprep.subr.bf16.mxu0 0
        %1051 = vmatpush1.bf16.msra.mxu0 0
        %1052 = vmatprep.subr.bf16.mxu0 0
        %1053 = vmatpush1.bf16.msra.mxu0 0
        %1054 = vmatprep.subr.bf16.mxu0 0
        %1055 = vmatpush1.bf16.msra.mxu0 0
        %1056 = vmatprep.subr.bf16.mxu0 0
        %1057 = vmatpush1.bf16.msra.mxu0 0
        %1058 = vmatprep.mubr.bf16.mxu0 0
        %1059 = vmatmul.mubr.bf16.gmra.mrb[0].mxu0 %v954
        %v1060 = vpop.f32.mrb[0].mxu0
        %v1061 = vadd.f32 %v976, %v1060
        %v1062 = vpop.f32.mrb[0].mxu0
        %v1063 = vpop.f32.mrb[0].mxu0
        %v1064 = vpop.f32.mrb[0].mxu0
        %1065 = vdwg.mxu0
        %v1066 = vxor.u32 %v1061, 2147483648
        %v1067 = vmul.f32 %v1066, 1.442695
        %v1068 = vpow.pop %v1067
        %v1069 = vadd.f32 %v1068, 1.0
        %v1070 = vrcp.pop %v1069
        %v1071 = vmul.f32 1.0, %v1070
        %v1072 = vmul.f32 %v1061, %v1071
        %v1073 = vpack.c.bf16 %v1072, %v1072
        %v1074 = vld [vmem:[#allocation4] sm:$0xf]
        %v1075 = vld [vmem:[#allocation4 + $0x4] sm:$0xf]
        %v1076 = vld [vmem:[#allocation4 + $0x8] sm:$0xf]
        %v1077 = vld [vmem:[#allocation4 + $0xc] sm:$0xf]
        %v1078 = vld [vmem:[#allocation4 + $0x10] sm:$0xf]
        %v1079 = vld [vmem:[#allocation4 + $0x14] sm:$0xf]
        %v1080 = vld [vmem:[#allocation4 + $0x18] sm:$0xf]
        %v1081 = vld [vmem:[#allocation4 + $0x1c] sm:$0xf]
        %v1082 = vld [vmem:[#allocation4 + $0x20] sm:$0xf]
        %v1083 = vld [vmem:[#allocation4 + $0x24] sm:$0xf]
        %v1084 = vld [vmem:[#allocation4 + $0x28] sm:$0xf]
        %v1085 = vld [vmem:[#allocation4 + $0x2c] sm:$0xf]
        %v1086 = vld [vmem:[#allocation4 + $0x30] sm:$0xf]
        %v1087 = vld [vmem:[#allocation4 + $0x34] sm:$0xf]
        %v1088 = vld [vmem:[#allocation4 + $0x38] sm:$0xf]
        %v1089 = vld [vmem:[#allocation4 + $0x3c] sm:$0xf]
        %v1090 = vld [vmem:[%s7] sm:$0x1]
        %v1092 = vlaneseq
        %v1093 = vshrl.u32 %v1092, 7
        %v1094 = vsub.s32 0, %v1093
        %v1095 = vrot.slane %v1090, %v1094
        %v1113 = vunpack.c.l.b16 %v1074
        %v1114 = vunpack.c.l.b16 %v1075
        %v1115 = vunpack.c.l.b16 %v1076
        %v1116 = vunpack.c.l.b16 %v1077
        %v1117 = vunpack.c.l.b16 %v1078
        %v1118 = vunpack.c.l.b16 %v1079
        %v1119 = vunpack.c.l.b16 %v1080
        %v1120 = vunpack.c.l.b16 %v1081
        %v1121 = vunpack.c.l.b16 %v1082
        %v1122 = vunpack.c.l.b16 %v1083
        %v1123 = vunpack.c.l.b16 %v1084
        %v1124 = vunpack.c.l.b16 %v1085
        %v1125 = vunpack.c.l.b16 %v1086
        %v1126 = vunpack.c.l.b16 %v1087
        %v1127 = vunpack.c.l.b16 %v1088
        %v1128 = vunpack.c.l.b16 %v1089
        %v1129 = vpack.c.b16 %v1114, %v1113
        %v1130 = vpack.c.b16 %v1116, %v1115
        %v1131 = vpack.c.b16 %v1118, %v1117
        %v1132 = vpack.c.b16 %v1120, %v1119
        %v1133 = vpack.c.b16 %v1122, %v1121
        %v1134 = vpack.c.b16 %v1124, %v1123
        %v1135 = vpack.c.b16 %v1126, %v1125
        %v1136 = vpack.c.b16 %v1128, %v1127
        %1145 = vmatprep.subr.bf16.mxu0 0
        %1146 = vmatpush1.bf16.msra.mxu0 %v1129
        %1147 = vmatprep.subr.bf16.mxu0 0
        %1148 = vmatpush1.bf16.msra.mxu0 %v1130
        %1149 = vmatprep.subr.bf16.mxu0 0
        %1150 = vmatpush1.bf16.msra.mxu0 %v1131
        %1151 = vmatprep.subr.bf16.mxu0 0
        %1152 = vmatpush1.bf16.msra.mxu0 %v1132
        %1153 = vmatprep.subr.bf16.mxu0 0
        %1154 = vmatpush1.bf16.msra.mxu0 %v1133
        %1155 = vmatprep.subr.bf16.mxu0 0
        %1156 = vmatpush1.bf16.msra.mxu0 %v1134
        %1157 = vmatprep.subr.bf16.mxu0 0
        %1158 = vmatpush1.bf16.msra.mxu0 %v1135
        %1159 = vmatprep.subr.bf16.mxu0 0
        %1160 = vmatpush1.bf16.msra.mxu0 %v1136
        %1161 = vmatprep.subr.bf16.mxu0 0
        %1162 = vmatpush1.bf16.msra.mxu0 0
        %1163 = vmatprep.subr.bf16.mxu0 0
        %1164 = vmatpush1.bf16.msra.mxu0 0
        %1165 = vmatprep.subr.bf16.mxu0 0
        %1166 = vmatpush1.bf16.msra.mxu0 0
        %1167 = vmatprep.subr.bf16.mxu0 0
        %1168 = vmatpush1.bf16.msra.mxu0 0
        %1169 = vmatprep.subr.bf16.mxu0 0
        %1170 = vmatpush1.bf16.msra.mxu0 0
        %1171 = vmatprep.subr.bf16.mxu0 0
        %1172 = vmatpush1.bf16.msra.mxu0 0
        %1173 = vmatprep.subr.bf16.mxu0 0
        %1174 = vmatpush1.bf16.msra.mxu0 0
        %1175 = vmatprep.subr.bf16.mxu0 0
        %1176 = vmatpush1.bf16.msra.mxu0 0
        %1177 = vmatprep.mubr.bf16.mxu0 0
        %1178 = vmatmul.mubr.bf16.gmra.mrb[0].mxu0 %v1073
        %v1179 = vpop.f32.mrb[0].mxu0
        %v1180 = vadd.f32 %v1095, %v1179
        %v1181 = vpop.f32.mrb[0].mxu0
        %v1182 = vpop.f32.mrb[0].mxu0
        %v1183 = vpop.f32.mrb[0].mxu0
        %1184 = vdwg.mxu0
        %v1185 = vxor.u32 %v1180, 2147483648
        %v1186 = vmul.f32 %v1185, 1.442695
        %v1187 = vpow.pop %v1186
        %v1188 = vadd.f32 %v1187, 1.0
        %v1189 = vrcp.pop %v1188
        %v1190 = vmul.f32 1.0, %v1189
        %v1191 = vmul.f32 %v1180, %v1190
        %v1192 = vpack.c.bf16 %v1191, %v1191
        %v1193 = vld [vmem:[#allocation6] sm:$0xff]
        %v1194 = vld [vmem:[#allocation6 + $0x8] sm:$0xff]
        %v1195 = vld [vmem:[#allocation6 + $0x10] sm:$0xff]
        %v1196 = vld [vmem:[#allocation6 + $0x18] sm:$0xff]
        %v1197 = vld [vmem:[#allocation6 + $0x20] sm:$0xff]
        %v1198 = vld [vmem:[#allocation6 + $0x28] sm:$0xff]
        %v1199 = vld [vmem:[#allocation6 + $0x30] sm:$0xff]
        %v1200 = vld [vmem:[#allocation6 + $0x38] sm:$0xff]
        %v1201 = vld [vmem:[#allocation6 + $0x40] sm:$0xff]
        %v1202 = vld [vmem:[#allocation6 + $0x48] sm:$0xff]
        %v1203 = vld [vmem:[#allocation6 + $0x50] sm:$0xff]
        %v1204 = vld [vmem:[#allocation6 + $0x58] sm:$0xff]
        %v1205 = vld [vmem:[#allocation6 + $0x60] sm:$0xff]
        %v1206 = vld [vmem:[#allocation6 + $0x68] sm:$0xff]
        %v1207 = vld [vmem:[#allocation6 + $0x70] sm:$0xff]
        %v1208 = vld [vmem:[#allocation6 + $0x78] sm:$0xff]
        %v1209 = vld [vmem:[%s9] sm:$0x3]
        %v1211 = vlaneseq
        %v1212 = vshrl.u32 %v1211, 7
        %v1213 = vsub.s32 0, %v1212
        %v1214 = vrot.slane %v1209, %v1213
        %v1215 = vlaneseq
        %v1216 = vshrl.u32 %v1215, 7
        %v1217 = vsub.s32 1, %v1216
        %v1218 = vrot.slane %v1209, %v1217
        %v1237 = vunpack.c.l.b16 %v1193
        %v1238 = vunpack.c.h.b16 %v1193
        %v1239 = vunpack.c.l.b16 %v1194
        %v1240 = vunpack.c.h.b16 %v1194
        %v1241 = vunpack.c.l.b16 %v1195
        %v1242 = vunpack.c.h.b16 %v1195
        %v1243 = vunpack.c.l.b16 %v1196
        %v1244 = vunpack.c.h.b16 %v1196
        %v1245 = vunpack.c.l.b16 %v1197
        %v1246 = vunpack.c.h.b16 %v1197
        %v1247 = vunpack.c.l.b16 %v1198
        %v1248 = vunpack.c.h.b16 %v1198
        %v1249 = vunpack.c.l.b16 %v1199
        %v1250 = vunpack.c.h.b16 %v1199
        %v1251 = vunpack.c.l.b16 %v1200
        %v1252 = vunpack.c.h.b16 %v1200
        %v1253 = vunpack.c.l.b16 %v1201
        %v1254 = vunpack.c.h.b16 %v1201
        %v1255 = vunpack.c.l.b16 %v1202
        %v1256 = vunpack.c.h.b16 %v1202
        %v1257 = vunpack.c.l.b16 %v1203
        %v1258 = vunpack.c.h.b16 %v1203
        %v1259 = vunpack.c.l.b16 %v1204
        %v1260 = vunpack.c.h.b16 %v1204
        %v1261 = vunpack.c.l.b16 %v1205
        %v1262 = vunpack.c.h.b16 %v1205
        %v1263 = vunpack.c.l.b16 %v1206
        %v1264 = vunpack.c.h.b16 %v1206
        %v1265 = vunpack.c.l.b16 %v1207
        %v1266 = vunpack.c.h.b16 %v1207
        %v1267 = vunpack.c.l.b16 %v1208
        %v1268 = vunpack.c.h.b16 %v1208
        %v1269 = vpack.c.b16 %v1239, %v1237
        %v1270 = vpack.c.b16 %v1240, %v1238
        %v1271 = vpack.c.b16 %v1243, %v1241
        %v1272 = vpack.c.b16 %v1244, %v1242
        %v1273 = vpack.c.b16 %v1247, %v1245
        %v1274 = vpack.c.b16 %v1248, %v1246
        %v1275 = vpack.c.b16 %v1251, %v1249
        %v1276 = vpack.c.b16 %v1252, %v1250
        %v1277 = vpack.c.b16 %v1255, %v1253
        %v1278 = vpack.c.b16 %v1256, %v1254
        %v1279 = vpack.c.b16 %v1259, %v1257
        %v1280 = vpack.c.b16 %v1260, %v1258
        %v1281 = vpack.c.b16 %v1263, %v1261
        %v1282 = vpack.c.b16 %v1264, %v1262
        %v1283 = vpack.c.b16 %v1267, %v1265
        %v1284 = vpack.c.b16 %v1268, %v1266
        %1301 = vmatprep.subr.bf16.mxu0 %v1270
        %1302 = vmatpush1.bf16.msra.mxu0 %v1269
        %1303 = vmatprep.subr.bf16.mxu0 %v1272
        %1304 = vmatpush1.bf16.msra.mxu0 %v1271
        %1305 = vmatprep.subr.bf16.mxu0 %v1274
        %1306 = vmatpush1.bf16.msra.mxu0 %v1273
        %1307 = vmatprep.subr.bf16.mxu0 %v1276
        %1308 = vmatpush1.bf16.msra.mxu0 %v1275
        %1309 = vmatprep.subr.bf16.mxu0 %v1278
        %1310 = vmatpush1.bf16.msra.mxu0 %v1277
        %1311 = vmatprep.subr.bf16.mxu0 %v1280
        %1312 = vmatpush1.bf16.msra.mxu0 %v1279
        %1313 = vmatprep.subr.bf16.mxu0 %v1282
        %1314 = vmatpush1.bf16.msra.mxu0 %v1281
        %1315 = vmatprep.subr.bf16.mxu0 %v1284
        %1316 = vmatpush1.bf16.msra.mxu0 %v1283
        %1317 = vmatprep.subr.bf16.mxu0 0
        %1318 = vmatpush1.bf16.msra.mxu0 0
        %1319 = vmatprep.subr.bf16.mxu0 0
        %1320 = vmatpush1.bf16.msra.mxu0 0
        %1321 = vmatprep.subr.bf16.mxu0 0
        %1322 = vmatpush1.bf16.msra.mxu0 0
        %1323 = vmatprep.subr.bf16.mxu0 0
        %1324 = vmatpush1.bf16.msra.mxu0 0
        %1325 = vmatprep.subr.bf16.mxu0 0
        %1326 = vmatpush1.bf16.msra.mxu0 0
        %1327 = vmatprep.subr.bf16.mxu0 0
        %1328 = vmatpush1.bf16.msra.mxu0 0
        %1329 = vmatprep.subr.bf16.mxu0 0
        %1330 = vmatpush1.bf16.msra.mxu0 0
        %1331 = vmatprep.subr.bf16.mxu0 0
        %1332 = vmatpush1.bf16.msra.mxu0 0
        %1333 = vmatprep.mubr.bf16.mxu0 0
        %1334 = vmatmul.mubr.bf16.gmra.mrb[0].mxu0 %v1192
        %v1335 = vpop.f32.mrb[0].mxu0
        %v1336 = vadd.f32 %v1214, %v1335
        %v1337 = vpop.f32.mrb[0].mxu0
        %v1338 = vadd.f32 %v1218, %v1337
        %v1339 = vpop.f32.mrb[0].mxu0
        %v1340 = vpop.f32.mrb[0].mxu0
        %1341 = vdwg.mxu0
        %1342 = vst [vmem:[%s829] sm:$0xff] %v1336
        %1343 = vst [vmem:[%s833] sm:$0xff] %v1338
        %v1344 = vld [vmem:[%s821] sm:$0xff]
        %v1345 = vmul.f32 %v1338, 0.5
        %v1346 = vmul.f32 %v1345, 1.442695
        %v1347 = vpow.pop %v1346
        %v1348 = vmul.f32 %v1344, %v1347
        %v1349 = vadd.f32 %v1348, %v1336
        %v1350 = vpack.c.bf16 %v1349, %v1349
        %v1351 = vld [vmem:[#allocation7] sm:$0xf]
        %v1352 = vld [vmem:[#allocation7 + $0x4] sm:$0xf]
        %v1353 = vld [vmem:[#allocation7 + $0x8] sm:$0xf]
        %v1354 = vld [vmem:[#allocation7 + $0xc] sm:$0xf]
        %v1355 = vld [vmem:[#allocation7 + $0x10] sm:$0xf]
        %v1356 = vld [vmem:[#allocation7 + $0x14] sm:$0xf]
        %v1357 = vld [vmem:[#allocation7 + $0x18] sm:$0xf]
        %v1358 = vld [vmem:[#allocation7 + $0x1c] sm:$0xf]
        %v1359 = vld [vmem:[#allocation7 + $0x20] sm:$0xf]
        %v1360 = vld [vmem:[#allocation7 + $0x24] sm:$0xf]
        %v1361 = vld [vmem:[#allocation7 + $0x28] sm:$0xf]
        %v1362 = vld [vmem:[#allocation7 + $0x2c] sm:$0xf]
        %v1363 = vld [vmem:[#allocation7 + $0x30] sm:$0xf]
        %v1364 = vld [vmem:[#allocation7 + $0x34] sm:$0xf]
        %v1365 = vld [vmem:[#allocation7 + $0x38] sm:$0xf]
        %v1366 = vld [vmem:[#allocation7 + $0x3c] sm:$0xf]
        %v1367 = vld [vmem:[%s11] sm:$0x1]
        %v1369 = vlaneseq
        %v1370 = vshrl.u32 %v1369, 7
        %v1371 = vsub.s32 0, %v1370
        %v1372 = vrot.slane %v1367, %v1371
        %v1390 = vunpack.c.l.b16 %v1351
        %v1391 = vunpack.c.l.b16 %v1352
        %v1392 = vunpack.c.l.b16 %v1353
        %v1393 = vunpack.c.l.b16 %v1354
        %v1394 = vunpack.c.l.b16 %v1355
        %v1395 = vunpack.c.l.b16 %v1356
        %v1396 = vunpack.c.l.b16 %v1357
        %v1397 = vunpack.c.l.b16 %v1358
        %v1398 = vunpack.c.l.b16 %v1359
        %v1399 = vunpack.c.l.b16 %v1360
        %v1400 = vunpack.c.l.b16 %v1361
        %v1401 = vunpack.c.l.b16 %v1362
        %v1402 = vunpack.c.l.b16 %v1363
        %v1403 = vunpack.c.l.b16 %v1364
        %v1404 = vunpack.c.l.b16 %v1365
        %v1405 = vunpack.c.l.b16 %v1366
        %v1406 = vpack.c.b16 %v1391, %v1390
        %v1407 = vpack.c.b16 %v1393, %v1392
        %v1408 = vpack.c.b16 %v1395, %v1394
        %v1409 = vpack.c.b16 %v1397, %v1396
        %v1410 = vpack.c.b16 %v1399, %v1398
        %v1411 = vpack.c.b16 %v1401, %v1400
        %v1412 = vpack.c.b16 %v1403, %v1402
        %v1413 = vpack.c.b16 %v1405, %v1404
        %1422 = vmatprep.subr.bf16.mxu0 0
        %1423 = vmatpush1.bf16.msra.mxu0 %v1406
        %1424 = vmatprep.subr.bf16.mxu0 0
        %1425 = vmatpush1.bf16.msra.mxu0 %v1407
        %1426 = vmatprep.subr.bf16.mxu0 0
        %1427 = vmatpush1.bf16.msra.mxu0 %v1408
        %1428 = vmatprep.subr.bf16.mxu0 0
        %1429 = vmatpush1.bf16.msra.mxu0 %v1409
        %1430 = vmatprep.subr.bf16.mxu0 0
        %1431 = vmatpush1.bf16.msra.mxu0 %v1410
        %1432 = vmatprep.subr.bf16.mxu0 0
        %1433 = vmatpush1.bf16.msra.mxu0 %v1411
        %1434 = vmatprep.subr.bf16.mxu0 0
        %1435 = vmatpush1.bf16.msra.mxu0 %v1412
        %1436 = vmatprep.subr.bf16.mxu0 0
        %1437 = vmatpush1.bf16.msra.mxu0 %v1413
        %1438 = vmatprep.subr.bf16.mxu0 0
        %1439 = vmatpush1.bf16.msra.mxu0 0
        %1440 = vmatprep.subr.bf16.mxu0 0
        %1441 = vmatpush1.bf16.msra.mxu0 0
        %1442 = vmatprep.subr.bf16.mxu0 0
        %1443 = vmatpush1.bf16.msra.mxu0 0
        %1444 = vmatprep.subr.bf16.mxu0 0
        %1445 = vmatpush1.bf16.msra.mxu0 0
        %1446 = vmatprep.subr.bf16.mxu0 0
        %1447 = vmatpush1.bf16.msra.mxu0 0
        %1448 = vmatprep.subr.bf16.mxu0 0
        %1449 = vmatpush1.bf16.msra.mxu0 0
        %1450 = vmatprep.subr.bf16.mxu0 0
        %1451 = vmatpush1.bf16.msra.mxu0 0
        %1452 = vmatprep.subr.bf16.mxu0 0
        %1453 = vmatpush1.bf16.msra.mxu0 0
        %1454 = vmatprep.mubr.bf16.mxu0 0
        %1455 = vmatmul.mubr.bf16.gmra.mrb[0].mxu0 %v1350
        %v1456 = vpop.f32.mrb[0].mxu0
        %v1457 = vadd.f32 %v1372, %v1456
        %v1458 = vpop.f32.mrb[0].mxu0
        %v1459 = vpop.f32.mrb[0].mxu0
        %v1460 = vpop.f32.mrb[0].mxu0
        %1461 = vdwg.mxu0
        %v1462 = vxor.u32 %v1457, 2147483648
        %v1463 = vmul.f32 %v1462, 1.442695
        %v1464 = vpow.pop %v1463
        %v1465 = vadd.f32 %v1464, 1.0
        %v1466 = vrcp.pop %v1465
        %v1467 = vmul.f32 1.0, %v1466
        %v1468 = vmul.f32 %v1457, %v1467
        %v1469 = vpack.c.bf16 %v1468, %v1468
        %v1470 = vld [vmem:[#allocation9] sm:$0xf]
        %v1471 = vld [vmem:[#allocation9 + $0x4] sm:$0xf]
        %v1472 = vld [vmem:[#allocation9 + $0x8] sm:$0xf]
        %v1473 = vld [vmem:[#allocation9 + $0xc] sm:$0xf]
        %v1474 = vld [vmem:[#allocation9 + $0x10] sm:$0xf]
        %v1475 = vld [vmem:[#allocation9 + $0x14] sm:$0xf]
        %v1476 = vld [vmem:[#allocation9 + $0x18] sm:$0xf]
        %v1477 = vld [vmem:[#allocation9 + $0x1c] sm:$0xf]
        %v1478 = vld [vmem:[#allocation9 + $0x20] sm:$0xf]
        %v1479 = vld [vmem:[#allocation9 + $0x24] sm:$0xf]
        %v1480 = vld [vmem:[#allocation9 + $0x28] sm:$0xf]
        %v1481 = vld [vmem:[#allocation9 + $0x2c] sm:$0xf]
        %v1482 = vld [vmem:[#allocation9 + $0x30] sm:$0xf]
        %v1483 = vld [vmem:[#allocation9 + $0x34] sm:$0xf]
        %v1484 = vld [vmem:[#allocation9 + $0x38] sm:$0xf]
        %v1485 = vld [vmem:[#allocation9 + $0x3c] sm:$0xf]
        %v1486 = vld [vmem:[%s13] sm:$0x1]
        %v1488 = vlaneseq
        %v1489 = vshrl.u32 %v1488, 7
        %v1490 = vsub.s32 0, %v1489
        %v1491 = vrot.slane %v1486, %v1490
        %v1509 = vunpack.c.l.b16 %v1470
        %v1510 = vunpack.c.l.b16 %v1471
        %v1511 = vunpack.c.l.b16 %v1472
        %v1512 = vunpack.c.l.b16 %v1473
        %v1513 = vunpack.c.l.b16 %v1474
        %v1514 = vunpack.c.l.b16 %v1475
        %v1515 = vunpack.c.l.b16 %v1476
        %v1516 = vunpack.c.l.b16 %v1477
        %v1517 = vunpack.c.l.b16 %v1478
        %v1518 = vunpack.c.l.b16 %v1479
        %v1519 = vunpack.c.l.b16 %v1480
        %v1520 = vunpack.c.l.b16 %v1481
        %v1521 = vunpack.c.l.b16 %v1482
        %v1522 = vunpack.c.l.b16 %v1483
        %v1523 = vunpack.c.l.b16 %v1484
        %v1524 = vunpack.c.l.b16 %v1485
        %v1525 = vpack.c.b16 %v1510, %v1509
        %v1526 = vpack.c.b16 %v1512, %v1511
        %v1527 = vpack.c.b16 %v1514, %v1513
        %v1528 = vpack.c.b16 %v1516, %v1515
        %v1529 = vpack.c.b16 %v1518, %v1517
        %v1530 = vpack.c.b16 %v1520, %v1519
        %v1531 = vpack.c.b16 %v1522, %v1521
        %v1532 = vpack.c.b16 %v1524, %v1523
        %1541 = vmatprep.subr.bf16.mxu0 0
        %1542 = vmatpush1.bf16.msra.mxu0 %v1525
        %1543 = vmatprep.subr.bf16.mxu0 0
        %1544 = vmatpush1.bf16.msra.mxu0 %v1526
        %1545 = vmatprep.subr.bf16.mxu0 0
        %1546 = vmatpush1.bf16.msra.mxu0 %v1527
        %1547 = vmatprep.subr.bf16.mxu0 0
        %1548 = vmatpush1.bf16.msra.mxu0 %v1528
        %1549 = vmatprep.subr.bf16.mxu0 0
        %1550 = vmatpush1.bf16.msra.mxu0 %v1529
        %1551 = vmatprep.subr.bf16.mxu0 0
        %1552 = vmatpush1.bf16.msra.mxu0 %v1530
        %1553 = vmatprep.subr.bf16.mxu0 0
        %1554 = vmatpush1.bf16.msra.mxu0 %v1531
        %1555 = vmatprep.subr.bf16.mxu0 0
        %1556 = vmatpush1.bf16.msra.mxu0 %v1532
        %1557 = vmatprep.subr.bf16.mxu0 0
        %1558 = vmatpush1.bf16.msra.mxu0 0
        %1559 = vmatprep.subr.bf16.mxu0 0
        %1560 = vmatpush1.bf16.msra.mxu0 0
        %1561 = vmatprep.subr.bf16.mxu0 0
        %1562 = vmatpush1.bf16.msra.mxu0 0
        %1563 = vmatprep.subr.bf16.mxu0 0
        %1564 = vmatpush1.bf16.msra.mxu0 0
        %1565 = vmatprep.subr.bf16.mxu0 0
        %1566 = vmatpush1.bf16.msra.mxu0 0
        %1567 = vmatprep.subr.bf16.mxu0 0
        %1568 = vmatpush1.bf16.msra.mxu0 0
        %1569 = vmatprep.subr.bf16.mxu0 0
        %1570 = vmatpush1.bf16.msra.mxu0 0
        %1571 = vmatprep.subr.bf16.mxu0 0
        %1572 = vmatpush1.bf16.msra.mxu0 0
        %1573 = vmatprep.mubr.bf16.mxu0 0
        %1574 = vmatmul.mubr.bf16.gmra.mrb[0].mxu0 %v1469
        %v1575 = vpop.f32.mrb[0].mxu0
        %v1576 = vadd.f32 %v1491, %v1575
        %v1577 = vpop.f32.mrb[0].mxu0
        %v1578 = vpop.f32.mrb[0].mxu0
        %v1579 = vpop.f32.mrb[0].mxu0
        %1580 = vdwg.mxu0
        %v1581 = vxor.u32 %v1576, 2147483648
        %v1582 = vmul.f32 %v1581, 1.442695
        %v1583 = vpow.pop %v1582
        %v1584 = vadd.f32 %v1583, 1.0
        %v1585 = vrcp.pop %v1584
        %v1586 = vmul.f32 1.0, %v1585
        %v1587 = vmul.f32 %v1576, %v1586
        %v1588 = vpack.c.bf16 %v1587, %v1587
        %v1589 = vld [vmem:[#allocation10] sm:$0xf]
        %v1590 = vld [vmem:[#allocation10 + $0x4] sm:$0xf]
        %v1591 = vld [vmem:[#allocation10 + $0x8] sm:$0xf]
        %v1592 = vld [vmem:[#allocation10 + $0xc] sm:$0xf]
        %v1593 = vld [vmem:[#allocation10 + $0x10] sm:$0xf]
        %v1594 = vld [vmem:[#allocation10 + $0x14] sm:$0xf]
        %v1595 = vld [vmem:[#allocation10 + $0x18] sm:$0xf]
        %v1596 = vld [vmem:[#allocation10 + $0x1c] sm:$0xf]
        %v1597 = vld [vmem:[#allocation10 + $0x20] sm:$0xf]
        %v1598 = vld [vmem:[#allocation10 + $0x24] sm:$0xf]
        %v1599 = vld [vmem:[#allocation10 + $0x28] sm:$0xf]
        %v1600 = vld [vmem:[#allocation10 + $0x2c] sm:$0xf]
        %v1601 = vld [vmem:[#allocation10 + $0x30] sm:$0xf]
        %v1602 = vld [vmem:[#allocation10 + $0x34] sm:$0xf]
        %v1603 = vld [vmem:[#allocation10 + $0x38] sm:$0xf]
        %v1604 = vld [vmem:[#allocation10 + $0x3c] sm:$0xf]
        %v1605 = vld [vmem:[%s15] sm:$0x1]
        %v1607 = vlaneseq
        %v1608 = vshrl.u32 %v1607, 7
        %v1609 = vsub.s32 0, %v1608
        %v1610 = vrot.slane %v1605, %v1609
        %v1628 = vunpack.c.l.b16 %v1589
        %v1629 = vunpack.c.l.b16 %v1590
        %v1630 = vunpack.c.l.b16 %v1591
        %v1631 = vunpack.c.l.b16 %v1592
        %v1632 = vunpack.c.l.b16 %v1593
        %v1633 = vunpack.c.l.b16 %v1594
        %v1634 = vunpack.c.l.b16 %v1595
        %v1635 = vunpack.c.l.b16 %v1596
        %v1636 = vunpack.c.l.b16 %v1597
        %v1637 = vunpack.c.l.b16 %v1598
        %v1638 = vunpack.c.l.b16 %v1599
        %v1639 = vunpack.c.l.b16 %v1600
        %v1640 = vunpack.c.l.b16 %v1601
        %v1641 = vunpack.c.l.b16 %v1602
        %v1642 = vunpack.c.l.b16 %v1603
        %v1643 = vunpack.c.l.b16 %v1604
        %v1644 = vpack.c.b16 %v1629, %v1628
        %v1645 = vpack.c.b16 %v1631, %v1630
        %v1646 = vpack.c.b16 %v1633, %v1632
        %v1647 = vpack.c.b16 %v1635, %v1634
        %v1648 = vpack.c.b16 %v1637, %v1636
        %v1649 = vpack.c.b16 %v1639, %v1638
        %v1650 = vpack.c.b16 %v1641, %v1640
        %v1651 = vpack.c.b16 %v1643, %v1642
        %1660 = vmatprep.subr.bf16.mxu0 0
        %1661 = vmatpush1.bf16.msra.mxu0 %v1644
        %1662 = vmatprep.subr.bf16.mxu0 0
        %1663 = vmatpush1.bf16.msra.mxu0 %v1645
        %1664 = vmatprep.subr.bf16.mxu0 0
        %1665 = vmatpush1.bf16.msra.mxu0 %v1646
        %1666 = vmatprep.subr.bf16.mxu0 0
        %1667 = vmatpush1.bf16.msra.mxu0 %v1647
        %1668 = vmatprep.subr.bf16.mxu0 0
        %1669 = vmatpush1.bf16.msra.mxu0 %v1648
        %1670 = vmatprep.subr.bf16.mxu0 0
        %1671 = vmatpush1.bf16.msra.mxu0 %v1649
        %1672 = vmatprep.subr.bf16.mxu0 0
        %1673 = vmatpush1.bf16.msra.mxu0 %v1650
        %1674 = vmatprep.subr.bf16.mxu0 0
        %1675 = vmatpush1.bf16.msra.mxu0 %v1651
        %1676 = vmatprep.subr.bf16.mxu0 0
        %1677 = vmatpush1.bf16.msra.mxu0 0
        %1678 = vmatprep.subr.bf16.mxu0 0
        %1679 = vmatpush1.bf16.msra.mxu0 0
        %1680 = vmatprep.subr.bf16.mxu0 0
        %1681 = vmatpush1.bf16.msra.mxu0 0
        %1682 = vmatprep.subr.bf16.mxu0 0
        %1683 = vmatpush1.bf16.msra.mxu0 0
        %1684 = vmatprep.subr.bf16.mxu0 0
        %1685 = vmatpush1.bf16.msra.mxu0 0
        %1686 = vmatprep.subr.bf16.mxu0 0
        %1687 = vmatpush1.bf16.msra.mxu0 0
        %1688 = vmatprep.subr.bf16.mxu0 0
        %1689 = vmatpush1.bf16.msra.mxu0 0
        %1690 = vmatprep.subr.bf16.mxu0 0
        %1691 = vmatpush1.bf16.msra.mxu0 0
        %1692 = vmatprep.mubr.bf16.mxu0 0
        %1693 = vmatmul.mubr.bf16.gmra.mrb[0].mxu0 %v1588
        %v1694 = vpop.f32.mrb[0].mxu0
        %v1695 = vadd.f32 %v1610, %v1694
        %v1696 = vpop.f32.mrb[0].mxu0
        %v1697 = vpop.f32.mrb[0].mxu0
        %v1698 = vpop.f32.mrb[0].mxu0
        %1699 = vdwg.mxu0
        %v1700 = vxor.u32 %v1695, 2147483648
        %v1701 = vmul.f32 %v1700, 1.442695
        %v1702 = vpow.pop %v1701
        %v1703 = vadd.f32 %v1702, 1.0
        %v1704 = vrcp.pop %v1703
        %v1705 = vmul.f32 1.0, %v1704
        %v1706 = vmul.f32 %v1695, %v1705
        %v1707 = vpack.c.bf16 %v1706, %v1706
        %v1708 = vld [vmem:[#allocation12] sm:$0xf]
        %v1709 = vld [vmem:[#allocation12 + $0x4] sm:$0xf]
        %v1710 = vld [vmem:[#allocation12 + $0x8] sm:$0xf]
        %v1711 = vld [vmem:[#allocation12 + $0xc] sm:$0xf]
        %v1712 = vld [vmem:[#allocation12 + $0x10] sm:$0xf]
        %v1713 = vld [vmem:[#allocation12 + $0x14] sm:$0xf]
        %v1714 = vld [vmem:[#allocation12 + $0x18] sm:$0xf]
        %v1715 = vld [vmem:[#allocation12 + $0x1c] sm:$0xf]
        %v1716 = vld [vmem:[#allocation12 + $0x20] sm:$0xf]
        %v1717 = vld [vmem:[#allocation12 + $0x24] sm:$0xf]
        %v1718 = vld [vmem:[#allocation12 + $0x28] sm:$0xf]
        %v1719 = vld [vmem:[#allocation12 + $0x2c] sm:$0xf]
        %v1720 = vld [vmem:[#allocation12 + $0x30] sm:$0xf]
        %v1721 = vld [vmem:[#allocation12 + $0x34] sm:$0xf]
        %v1722 = vld [vmem:[#allocation12 + $0x38] sm:$0xf]
        %v1723 = vld [vmem:[#allocation12 + $0x3c] sm:$0xf]
        %v1724 = vld [vmem:[%s17] sm:$0x1]
        %v1726 = vlaneseq
        %v1727 = vshrl.u32 %v1726, 7
        %v1728 = vsub.s32 0, %v1727
        %v1729 = vrot.slane %v1724, %v1728
        %v1747 = vunpack.c.l.b16 %v1708
        %v1748 = vunpack.c.l.b16 %v1709
        %v1749 = vunpack.c.l.b16 %v1710
        %v1750 = vunpack.c.l.b16 %v1711
        %v1751 = vunpack.c.l.b16 %v1712
        %v1752 = vunpack.c.l.b16 %v1713
        %v1753 = vunpack.c.l.b16 %v1714
        %v1754 = vunpack.c.l.b16 %v1715
        %v1755 = vunpack.c.l.b16 %v1716
        %v1756 = vunpack.c.l.b16 %v1717
        %v1757 = vunpack.c.l.b16 %v1718
        %v1758 = vunpack.c.l.b16 %v1719
        %v1759 = vunpack.c.l.b16 %v1720
        %v1760 = vunpack.c.l.b16 %v1721
        %v1761 = vunpack.c.l.b16 %v1722
        %v1762 = vunpack.c.l.b16 %v1723
        %v1763 = vpack.c.b16 %v1748, %v1747
        %v1764 = vpack.c.b16 %v1750, %v1749
        %v1765 = vpack.c.b16 %v1752, %v1751
        %v1766 = vpack.c.b16 %v1754, %v1753
        %v1767 = vpack.c.b16 %v1756, %v1755
        %v1768 = vpack.c.b16 %v1758, %v1757
        %v1769 = vpack.c.b16 %v1760, %v1759
        %v1770 = vpack.c.b16 %v1762, %v1761
        %1779 = vmatprep.subr.bf16.mxu0 0
        %1780 = vmatpush1.bf16.msra.mxu0 %v1763
        %1781 = vmatprep.subr.bf16.mxu0 0
        %1782 = vmatpush1.bf16.msra.mxu0 %v1764
        %1783 = vmatprep.subr.bf16.mxu0 0
        %1784 = vmatpush1.bf16.msra.mxu0 %v1765
        %1785 = vmatprep.subr.bf16.mxu0 0
        %1786 = vmatpush1.bf16.msra.mxu0 %v1766
        %1787 = vmatprep.subr.bf16.mxu0 0
        %1788 = vmatpush1.bf16.msra.mxu0 %v1767
        %1789 = vmatprep.subr.bf16.mxu0 0
        %1790 = vmatpush1.bf16.msra.mxu0 %v1768
        %1791 = vmatprep.subr.bf16.mxu0 0
        %1792 = vmatpush1.bf16.msra.mxu0 %v1769
        %1793 = vmatprep.subr.bf16.mxu0 0
        %1794 = vmatpush1.bf16.msra.mxu0 %v1770
        %1795 = vmatprep.subr.bf16.mxu0 0
        %1796 = vmatpush1.bf16.msra.mxu0 0
        %1797 = vmatprep.subr.bf16.mxu0 0
        %1798 = vmatpush1.bf16.msra.mxu0 0
        %1799 = vmatprep.subr.bf16.mxu0 0
        %1800 = vmatpush1.bf16.msra.mxu0 0
        %1801 = vmatprep.subr.bf16.mxu0 0
        %1802 = vmatpush1.bf16.msra.mxu0 0
        %1803 = vmatprep.subr.bf16.mxu0 0
        %1804 = vmatpush1.bf16.msra.mxu0 0
        %1805 = vmatprep.subr.bf16.mxu0 0
        %1806 = vmatpush1.bf16.msra.mxu0 0
        %1807 = vmatprep.subr.bf16.mxu0 0
        %1808 = vmatpush1.bf16.msra.mxu0 0
        %1809 = vmatprep.subr.bf16.mxu0 0
        %1810 = vmatpush1.bf16.msra.mxu0 0
        %1811 = vmatprep.mubr.bf16.mxu0 0
        %1812 = vmatmul.mubr.bf16.gmra.mrb[0].mxu0 %v1707
        %v1813 = vpop.f32.mrb[0].mxu0
        %v1814 = vadd.f32 %v1729, %v1813
        %v1815 = vpop.f32.mrb[0].mxu0
        %v1816 = vpop.f32.mrb[0].mxu0
        %v1817 = vpop.f32.mrb[0].mxu0
        %1818 = vdwg.mxu0
        %v1819 = vxor.u32 %v1814, 2147483648
        %v1820 = vmul.f32 %v1819, 1.442695
        %v1821 = vpow.pop %v1820
        %v1822 = vadd.f32 %v1821, 1.0
        %v1823 = vrcp.pop %v1822
        %v1824 = vmul.f32 1.0, %v1823
        %v1825 = vmul.f32 %v1814, %v1824
        %v1826 = vpack.c.bf16 %v1825, %v1825
        %v1827 = vld [vmem:[#allocation13] sm:$0xf]
        %v1828 = vld [vmem:[#allocation13 + $0x4] sm:$0xf]
        %v1829 = vld [vmem:[#allocation13 + $0x8] sm:$0xf]
        %v1830 = vld [vmem:[#allocation13 + $0xc] sm:$0xf]
        %v1831 = vld [vmem:[#allocation13 + $0x10] sm:$0xf]
        %v1832 = vld [vmem:[#allocation13 + $0x14] sm:$0xf]
        %v1833 = vld [vmem:[#allocation13 + $0x18] sm:$0xf]
        %v1834 = vld [vmem:[#allocation13 + $0x1c] sm:$0xf]
        %v1835 = vld [vmem:[#allocation13 + $0x20] sm:$0xf]
        %v1836 = vld [vmem:[#allocation13 + $0x24] sm:$0xf]
        %v1837 = vld [vmem:[#allocation13 + $0x28] sm:$0xf]
        %v1838 = vld [vmem:[#allocation13 + $0x2c] sm:$0xf]
        %v1839 = vld [vmem:[#allocation13 + $0x30] sm:$0xf]
        %v1840 = vld [vmem:[#allocation13 + $0x34] sm:$0xf]
        %v1841 = vld [vmem:[#allocation13 + $0x38] sm:$0xf]
        %v1842 = vld [vmem:[#allocation13 + $0x3c] sm:$0xf]
        %v1843 = vld [vmem:[%s19] sm:$0x1]
        %v1845 = vlaneseq
        %v1846 = vshrl.u32 %v1845, 7
        %v1847 = vsub.s32 0, %v1846
        %v1848 = vrot.slane %v1843, %v1847
        %v1866 = vunpack.c.l.b16 %v1827
        %v1867 = vunpack.c.l.b16 %v1828
        %v1868 = vunpack.c.l.b16 %v1829
        %v1869 = vunpack.c.l.b16 %v1830
        %v1870 = vunpack.c.l.b16 %v1831
        %v1871 = vunpack.c.l.b16 %v1832
        %v1872 = vunpack.c.l.b16 %v1833
        %v1873 = vunpack.c.l.b16 %v1834
        %v1874 = vunpack.c.l.b16 %v1835
        %v1875 = vunpack.c.l.b16 %v1836
        %v1876 = vunpack.c.l.b16 %v1837
        %v1877 = vunpack.c.l.b16 %v1838
        %v1878 = vunpack.c.l.b16 %v1839
        %v1879 = vunpack.c.l.b16 %v1840
        %v1880 = vunpack.c.l.b16 %v1841
        %v1881 = vunpack.c.l.b16 %v1842
        %v1882 = vpack.c.b16 %v1867, %v1866
        %v1883 = vpack.c.b16 %v1869, %v1868
        %v1884 = vpack.c.b16 %v1871, %v1870
        %v1885 = vpack.c.b16 %v1873, %v1872
        %v1886 = vpack.c.b16 %v1875, %v1874
        %v1887 = vpack.c.b16 %v1877, %v1876
        %v1888 = vpack.c.b16 %v1879, %v1878
        %v1889 = vpack.c.b16 %v1881, %v1880
        %1898 = vmatprep.subr.bf16.mxu0 0
        %1899 = vmatpush1.bf16.msra.mxu0 %v1882
        %1900 = vmatprep.subr.bf16.mxu0 0
        %1901 = vmatpush1.bf16.msra.mxu0 %v1883
        %1902 = vmatprep.subr.bf16.mxu0 0
        %1903 = vmatpush1.bf16.msra.mxu0 %v1884
        %1904 = vmatprep.subr.bf16.mxu0 0
        %1905 = vmatpush1.bf16.msra.mxu0 %v1885
        %1906 = vmatprep.subr.bf16.mxu0 0
        %1907 = vmatpush1.bf16.msra.mxu0 %v1886
        %1908 = vmatprep.subr.bf16.mxu0 0
        %1909 = vmatpush1.bf16.msra.mxu0 %v1887
        %1910 = vmatprep.subr.bf16.mxu0 0
        %1911 = vmatpush1.bf16.msra.mxu0 %v1888
        %1912 = vmatprep.subr.bf16.mxu0 0
        %1913 = vmatpush1.bf16.msra.mxu0 %v1889
        %1914 = vmatprep.subr.bf16.mxu0 0
        %1915 = vmatpush1.bf16.msra.mxu0 0
        %1916 = vmatprep.subr.bf16.mxu0 0
        %1917 = vmatpush1.bf16.msra.mxu0 0
        %1918 = vmatprep.subr.bf16.mxu0 0
        %1919 = vmatpush1.bf16.msra.mxu0 0
        %1920 = vmatprep.subr.bf16.mxu0 0
        %1921 = vmatpush1.bf16.msra.mxu0 0
        %1922 = vmatprep.subr.bf16.mxu0 0
        %1923 = vmatpush1.bf16.msra.mxu0 0
        %1924 = vmatprep.subr.bf16.mxu0 0
        %1925 = vmatpush1.bf16.msra.mxu0 0
        %1926 = vmatprep.subr.bf16.mxu0 0
        %1927 = vmatpush1.bf16.msra.mxu0 0
        %1928 = vmatprep.subr.bf16.mxu0 0
        %1929 = vmatpush1.bf16.msra.mxu0 0
        %1930 = vmatprep.mubr.bf16.mxu0 0
        %1931 = vmatmul.mubr.bf16.gmra.mrb[0].mxu0 %v1826
        %v1932 = vpop.f32.mrb[0].mxu0
        %v1933 = vadd.f32 %v1848, %v1932
        %v1934 = vpop.f32.mrb[0].mxu0
        %v1935 = vpop.f32.mrb[0].mxu0
        %v1936 = vpop.f32.mrb[0].mxu0
        %1937 = vdwg.mxu0
        %1938 = vst [vmem:[%s825] sm:$0xff] %v1933
        %p1939 = scmp.lt.s32.totalorder %s39, 1
        %s1940 = scalar_select %p1939, %s39, 1
        %s1941 = smul.addr %s1940, 8
        %s1942 = scalar_lea.vmem %s20, %s1941
        %p1943 = scmp.lt.s32.totalorder %s39, 1
        %s1944 = scalar_select %p1943, %s39, 1
        %s1945 = smul.addr %s1944, 8
        %s1946 = scalar_lea.vmem %s21, %s1945
        %p1947 = scmp.lt.s32.totalorder %s39, 1
        %s1948 = scalar_select %p1947, %s39, 1
        %s1949 = smul.addr %s1948, 8
        %s1950 = scalar_lea.vmem %s22, %s1949
        // Predicated region
        $region133: #{vde_forward.1} parent=99 // pred_check
          %p1951 = pneg %p487
        $region134: #{vde_forward.1} parent=99 // pred_check_branch
          %1953 = sbr.rel (%p1951) target = $region136
        $region135: #{vde_forward.1} parent=99 // pred_region
          _
        $region136: #{vde_forward.1} parent=99 // pred_fallthru
          _
        // Predicated region
        $region137: #{vde_forward.1} parent=99 // pred_check
          %p1954 = pneg %p513
        $region138: #{vde_forward.1} parent=99 // pred_check_branch
          %1956 = sbr.rel (%p1954) target = $region140
        $region139: #{vde_forward.1} parent=99 // pred_region
          _
        $region140: #{vde_forward.1} parent=99 // pred_fallthru
          _
        // Predicated region
        $region141: #{vde_forward.1} parent=99 // pred_check
          %p1957 = pneg %p539
        $region142: #{vde_forward.1} parent=99 // pred_check_branch
          %1959 = sbr.rel (%p1957) target = $region144
        $region143: #{vde_forward.1} parent=99 // pred_region
          _
        $region144: #{vde_forward.1} parent=99 // pred_fallthru
          _
      $region100: #{vde_forward.1} parent=5 // pred_fallthru
        _
      %p1960 = scmp.le.s32.totalorder 2, %s34
      // Predicated region
      $region145: #{vde_forward.1} parent=5 // pred_check
        %p1961 = pneg %p1960
      $region146: #{vde_forward.1} parent=5 // pred_check_branch
        %1963 = sbr.rel (%p1961) target = $region148
      $region147: #{vde_forward.1} parent=5 // pred_region
        %s1964 = ssub.s32 %s34, 2
        // Predicated region
        $region149: #{vde_forward.1} parent=147 // pred_check
          %p1965 = pneg %p493
        $region150: #{vde_forward.1} parent=147 // pred_check_branch
          %1967 = sbr.rel (%p1965) target = $region152
        $region151: #{vde_forward.1} parent=147 // pred_region
          %p1968 = scmp.lt.s32.totalorder %s40, 1
          %s1969 = scalar_select %p1968, %s40, 1
          %s1970 = smul.addr %s1969, 8
          %s1971 = scalar_lea.vmem %s20, %s1970
        $region152: #{vde_forward.1} parent=147 // pred_fallthru
          _
        // Predicated region
        $region153: #{vde_forward.1} parent=147 // pred_check
          %p1972 = pneg %p519
        $region154: #{vde_forward.1} parent=147 // pred_check_branch
          %1974 = sbr.rel (%p1972) target = $region156
        $region155: #{vde_forward.1} parent=147 // pred_region
          %p1975 = scmp.lt.s32.totalorder %s40, 1
          %s1976 = scalar_select %p1975, %s40, 1
          %s1977 = smul.addr %s1976, 8
          %s1978 = scalar_lea.vmem %s21, %s1977
        $region156: #{vde_forward.1} parent=147 // pred_fallthru
          _
        // Predicated region
        $region157: #{vde_forward.1} parent=147 // pred_check
          %p1979 = pneg %p545
        $region158: #{vde_forward.1} parent=147 // pred_check_branch
          %1981 = sbr.rel (%p1979) target = $region160
        $region159: #{vde_forward.1} parent=147 // pred_region
          %p1982 = scmp.lt.s32.totalorder %s40, 1
          %s1983 = scalar_select %p1982, %s40, 1
          %s1984 = smul.addr %s1983, 8
          %s1985 = scalar_lea.vmem %s22, %s1984
        $region160: #{vde_forward.1} parent=147 // pred_fallthru
          _
      $region148: #{vde_forward.1} parent=5 // pred_fallthru
        _
    $region6: #{vde_forward.1} parent=1 // loop_footer
      %s38 = sadd.s32 1, %s34
    $region7: #{vde_forward.1} parent=1 // loop_footer_branch
      %33 = sbr.rel target = $region3
    $region8: #{vde_forward.1} parent=1 // loop_exit
      _
    %1986 = vsyncpa [#allocation3], 1
    %s1987 = scalar_lea.sflag [#allocation3], 1
    %1988 = vsyncpa %s1987, 1
    %1989 = vsyncpa [#allocation5], 1
    %1990 = vsyncpa [#allocation8], 1
    %1991 = vsyncpa [#allocation11], 1
    %1992 = vsyncpa [#allocation14], 1

</llo_original>
